<compile_context>
chip_gen: v7x
topology: tpu7x:2x2x1
jax: 0.10.0
libtpu: 0.0.40
codegen_flags: <defaults>
</compile_context>

<pallas_src>
import numpy as np
import jax
import jax.numpy as jnp
from jax.experimental import pallas as pl
from jax.experimental.pallas import tpu as pltpu

# OGB categorical feature cardinalities (get_atom_feature_dims / get_bond_feature_dims)
FULL_ATOM_FEATURE_DIMS = [119, 4, 12, 12, 10, 6, 6, 2, 2]
FULL_BOND_FEATURE_DIMS = [5, 6, 2]
ATOM_OFFSETS = np.concatenate([[0], np.cumsum(FULL_ATOM_FEATURE_DIMS[:-1])]).astype(np.int32)
BOND_OFFSETS = np.concatenate([[0], np.cumsum(FULL_BOND_FEATURE_DIMS[:-1])]).astype(np.int32)


def _round_up(x, m):
    return (x + m - 1) // m * m


# ------------------------------ Pallas kernel --------------------------------

def gin_stack_kernel(h0_ref, src_ref, dst_ref, bond_oh_ref,   # layer-invariant (VMEM)
                     bond_tab_ref, w1_ref, w2_ref, vec_ref,   # layer-indexed (VMEM)
                     out_ref):
    layer = pl.program_id(0)
    num_layers = pl.num_programs(0)
    n_pad = h0_ref.shape[0]
    e_pad = bond_oh_ref.shape[0]

    # ---- layer 0: seed the VMEM-resident accumulator (= out_ref) with h0 ----
    @pl.when(layer == 0)
    def _():
        out_ref[...] = h0_ref[...]

    h = out_ref[...]                                   # (n_pad, D) f32, resident
    h_bf = h.astype(jnp.bfloat16)

    # ---- BondEncoder (this layer's table): edge_emb = one-hot @ table (MXU) -
    msg = jnp.dot(bond_oh_ref[...], bond_tab_ref[0],
                  preferred_element_type=jnp.float32)  # (e_pad, D)

    # ---- gather x_j = h[src] via MXU one-hot matmul --------------------------
    # Padded edges carry src/dst = -1 -> all-zero one-hot rows/cols -> no effect.
    col_ids = jax.lax.broadcasted_iota(jnp.int32, (e_pad, n_pad), 1)
    src_oh = (col_ids == src_ref[...]).astype(jnp.bfloat16)            # (e_pad, n_pad)
    x_j = jnp.dot(src_oh, h_bf, preferred_element_type=jnp.float32)    # (e_pad, D)

    m = jnp.maximum(x_j + msg, 0.0).astype(jnp.bfloat16)               # relu(x_j + edge_emb)

    # ---- scatter-add agg[dst] += m via transposed dst one-hot (MXU) ---------
    row_ids = jax.lax.broadcasted_iota(jnp.int32, (n_pad, e_pad), 0)
    dst_oh_t = (row_ids == dst_ref[...]).astype(jnp.bfloat16)          # (n_pad, e_pad)
    agg = jnp.dot(dst_oh_t, m, preferred_element_type=jnp.float32)     # (n_pad, D)

    # ---- GINConv MLP (BN scales folded into W, biases into shifts) + outer BN
    vec = vec_ref[0]                                   # (8, D) f32
    t1, tout, eps = vec[0:1, :], vec[1:2, :], vec[2:3, :]

    z = (1.0 + eps) * h + agg
    z1 = jnp.maximum(
        jnp.dot(z.astype(jnp.bfloat16), w1_ref[0],
                preferred_element_type=jnp.float32) + t1, 0.0)
    hbn = jnp.dot(z1.astype(jnp.bfloat16), w2_ref[0],
                  preferred_element_type=jnp.float32) + tout

    is_last = layer == num_layers - 1                  # ReLU on all but last layer
    hbn = jnp.where(jnp.logical_or(is_last, hbn > 0.0), hbn, 0.0)
    out_ref[...] = hbn + h                             # residual (module default True)


# ------------------------------ kernel wrapper --------------------------------

def gin_stack_forward(h0, src_ids, dst_ids, bond_oh, bond_tabs, w1, w2, vecs):
    num_layers, bond_pad, emb_dim = bond_tabs.shape
    n_pad = h0.shape[0]
    e_pad = bond_oh.shape[0]

    grid_spec = pltpu.PrefetchScalarGridSpec(
        num_scalar_prefetch=0,
        grid=(num_layers,),
        in_specs=[
            pl.BlockSpec((n_pad, emb_dim), lambda l: (0, 0)),           # h0
            pl.BlockSpec((e_pad, 1), lambda l: (0, 0)),                 # src ids
            pl.BlockSpec((1, e_pad), lambda l: (0, 0)),                 # dst ids
            pl.BlockSpec((e_pad, bond_pad), lambda l: (0, 0)),          # bond one-hot
            pl.BlockSpec((1, bond_pad, emb_dim), lambda l: (l, 0, 0)),  # bond tables
            pl.BlockSpec((1, emb_dim, emb_dim), lambda l: (l, 0, 0)),   # W1 (BN-folded)
            pl.BlockSpec((1, emb_dim, emb_dim), lambda l: (l, 0, 0)),   # W2 (BN-folded)
            pl.BlockSpec((1, 8, emb_dim), lambda l: (l, 0, 0)),         # t1/tout/eps rows
        ],
        out_specs=pl.BlockSpec((n_pad, emb_dim), lambda l: (0, 0)),     # resident h
    )

    # VMEM budget per generation: ~48 MiB on v7x (64 MiB phys), ~112 MiB on v5e/v6e.
    try:
        vmem_cap = int(pltpu.get_tpu_info().vmem_capacity_bytes)
    except Exception:
        vmem_cap = 64 * 1024 * 1024
    vmem_limit = int(min(max(vmem_cap - (16 << 20), 32 << 20), 112 << 20))

    flops = 2 * num_layers * (e_pad * bond_pad * emb_dim        # bond one-hot matmul
                              + 2 * e_pad * n_pad * emb_dim     # gather + scatter matmuls
                              + 2 * n_pad * emb_dim * emb_dim)  # W1, W2
    bytes_accessed = (2 * n_pad * emb_dim * 4                    # h0 in + h out
                      + e_pad * bond_pad * 2 + 2 * e_pad * 4     # one-hot + edge ids
                      + num_layers * (bond_pad * emb_dim * 2
                                      + 2 * emb_dim * emb_dim * 2
                                      + 8 * emb_dim * 4))

    return pl.pallas_call(
        gin_stack_kernel,
        out_shape=jax.ShapeDtypeStruct((n_pad, emb_dim), jnp.float32),
        grid_spec=grid_spec,
        compiler_params=pltpu.CompilerParams(
            dimension_semantics=("arbitrary",),     # layers chain through out_ref
            vmem_limit_bytes=vmem_limit,
        ),
        cost_estimate=pl.CostEstimate(flops=flops, transcendentals=0,
                                      bytes_accessed=bytes_accessed),
    )(h0, src_ids, dst_ids, bond_oh, bond_tabs, w1, w2, vecs)


# ------------------------------ parameter setup -------------------------------

def _xavier_uniform(key, shape):
    fan_in, fan_out = shape
    limit = (6.0 / (fan_in + fan_out)) ** 0.5
    return jax.random.uniform(key, shape, jnp.float32, -limit, limit)


def _concat_embedding_table(key, dims, emb_dim, pad_rows):
    keys = jax.random.split(key, len(dims))
    tables = [_xavier_uniform(k, (d, emb_dim)) for k, d in zip(keys, dims)]
    table = jnp.concatenate(tables, axis=0)
    return jnp.pad(table, ((0, pad_rows - table.shape[0]), (0, 0)))


def _fold_bn(gamma, beta, mean, var, eps=1e-5):
    scale = gamma / jnp.sqrt(var + eps)
    shift = beta - mean * scale
    return scale, shift


def init_params(key, num_layers, emb_dim, bond_pad):
    """Eval-mode params: BN scales folded into W1/W2 columns, linear biases
    folded into the BN shifts (t1 <- b1*s1 + t1, tout <- b2*sout + tout)."""
    key, ka = jax.random.split(key)
    atom_table = _concat_embedding_table(ka, FULL_ATOM_FEATURE_DIMS, emb_dim,
                                         sum(FULL_ATOM_FEATURE_DIMS))
    ones = jnp.ones((emb_dim,), jnp.float32)
    zeros = jnp.zeros((emb_dim,), jnp.float32)
    bond_tabs, w1s, w2s, vecs = [], [], [], []
    for _ in range(num_layers):
        key, kb, k1, k2 = jax.random.split(key, 4)
        w1 = _xavier_uniform(k1, (emb_dim, emb_dim))
        w2 = _xavier_uniform(k2, (emb_dim, emb_dim))
        b1, b2 = zeros, zeros                          # Linear biases (demo init)
        s1, t1 = _fold_bn(ones, zeros, zeros, ones)    # BN inside GIN MLP (eval)
        so, to = _fold_bn(ones, zeros, zeros, ones)    # outer BatchNorm1d (eval)
        bond_tabs.append(_concat_embedding_table(kb, FULL_BOND_FEATURE_DIMS,
                                                 emb_dim, bond_pad))
        w1s.append(w1 * s1[None, :])
        w2s.append(w2 * so[None, :])
        # rows: t1(+b1 folded), tout(+b2 folded), eps (GIN eps init 0), pad
        vecs.append(jnp.stack([b1 * s1 + t1, b2 * so + to, zeros] + [zeros] * 5))
    return {
        "atom_table": atom_table,
        "bond_tables": jnp.stack(bond_tabs),
        "w1": jnp.stack(w1s),
        "w2": jnp.stack(w2s),
        "vecs": jnp.stack(vecs),
    }


# ------------------------------- model forward --------------------------------

def _multi_onehot(idx, dims, pad_rows, pad_cols):
    pieces = [jax.nn.one_hot(idx[:, i], d, dtype=jnp.float32)
              for i, d in enumerate(dims)]
    oh = jnp.concatenate(pieces, axis=1)
    return jnp.pad(oh, ((0, pad_rows - oh.shape[0]), (0, pad_cols - oh.shape[1])))


def gin_node_embedding_forward(x, edge_index, edge_attr, params):
    n = x.shape[0]
    e = edge_index.shape[1]
    emb_dim = params["atom_table"].shape[1]
    bond_pad = params["bond_tables"].shape[1]
    n_pad = _round_up(max(n, 8), 128)    # lane-friendly one-hot contraction dims
    e_pad = _round_up(max(e, 8), 128)

    # AtomEncoder hoisted out of the kernel: plain XLA gather + sum, used once.
    h0 = jnp.take(params["atom_table"],
                  x.astype(jnp.int32) + jnp.asarray(ATOM_OFFSETS)[None, :],
                  axis=0).sum(axis=1)
    h0 = jnp.pad(h0, ((0, n_pad - n), (0, 0))).astype(jnp.float32)

    # Edge indices; padded edges get -1 -> zero one-hot rows/cols in-kernel.
    src = jnp.full((e_pad, 1), -1, jnp.int32).at[:e, 0].set(edge_index[0].astype(jnp.int32))
    dst = jnp.full((1, e_pad), -1, jnp.int32).at[0, :e].set(edge_index[1].astype(jnp.int32))

    # Bond one-hots are exact in bf16; MXU operands go in as bf16 (f32 accumulate).
    bond_oh = _multi_onehot(edge_attr, FULL_BOND_FEATURE_DIMS, e_pad,
                            bond_pad).astype(jnp.bfloat16)

    out = gin_stack_forward(
        h0, src, dst, bond_oh,
        params["bond_tables"].astype(jnp.bfloat16),
        params["w1"].astype(jnp.bfloat16),
        params["w2"].astype(jnp.bfloat16),
        params["vecs"])
    return out[:n]   # JK == 'last'


# ------------------------------- JAX reference ---------------------------------

def gin_reference(x, edge_index, edge_attr, params):
    """Pure-JAX eval-mode reference (same bf16-rounded weights, f32 math)."""
    h = jnp.take(params["atom_table"],
                 x.astype(jnp.int32) + jnp.asarray(ATOM_OFFSETS)[None, :],
                 axis=0).sum(axis=1)
    src, dst = edge_index[0], edge_index[1]
    bond_tabs = params["bond_tables"].astype(jnp.bfloat16).astype(jnp.float32)
    w1 = params["w1"].astype(jnp.bfloat16).astype(jnp.float32)
    w2 = params["w2"].astype(jnp.bfloat16).astype(jnp.float32)
    num_layers = w1.shape[0]
    for l in range(num_layers):
        t1, tout, eps = params["vecs"][l, 0], params["vecs"][l, 1], params["vecs"][l, 2]
        msg = jnp.take(bond_tabs[l],
                       edge_attr.astype(jnp.int32) + jnp.asarray(BOND_OFFSETS)[None, :],
                       axis=0).sum(axis=1)
        m = jnp.maximum(h[src] + msg, 0.0)
        agg = jnp.zeros_like(h).at[dst].add(m)
        z = (1.0 + eps) * h + agg
        z1 = jnp.maximum(z @ w1[l] + t1, 0.0)
        hbn = z1 @ w2[l] + tout
        if l != num_layers - 1:
            hbn = jnp.maximum(hbn, 0.0)
        h = hbn + h
    return h


# ------------------------------------ main -------------------------------------

if __name__ == "__main__":
    num_layers = 2
    emb_dim = 128
    n_nodes = 16
    n_edges = 32
    bond_pad = _round_up(sum(FULL_BOND_FEATURE_DIMS), 128)   # 128

    key = jax.random.PRNGKey(0)
    key, kp, kx, ke, ka = jax.random.split(key, 5)

    params = init_params(kp, num_layers, emb_dim, bond_pad)

    # categorical node features (N, 9) and edge features (E, 3)
    xkeys = jax.random.split(kx, len(FULL_ATOM_FEATURE_DIMS))
    x = jnp.stack([jax.random.randint(k, (n_nodes,), 0, d)
                   for k, d in zip(xkeys, FULL_ATOM_FEATURE_DIMS)], axis=1)
    akeys = jax.random.split(ka, len(FULL_BOND_FEATURE_DIMS))
    edge_attr = jnp.stack([jax.random.randint(k, (n_edges,), 0, d)
                           for k, d in zip(akeys, FULL_BOND_FEATURE_DIMS)], axis=1)
    edge_index = jax.random.randint(ke, (2, n_edges), 0, n_nodes)

    out = gin_node_embedding_forward(x, edge_index, edge_attr, params)
    jax.block_until_ready(out)
    assert out.shape == (n_nodes, emb_dim) and out.dtype == jnp.float32

    ref = gin_reference(x, edge_index, edge_attr, params)
    max_err = float(jnp.max(jnp.abs(out - ref)))
    assert jnp.allclose(out, ref, rtol=5e-2, atol=5e-2), max_err

    print("KERNEL_OK")
</pallas_src>

<mosaic_0001>
module attributes {stable_mosaic.version = 11 : i64} {
  func.func @gin_stack_kernel(%arg0: i32, %arg1: memref<128x128xf32, #tpu.memory_space<vmem>>, %arg2: memref<128x1xi32, #tpu.memory_space<vmem>>, %arg3: memref<1x128xi32, #tpu.memory_space<vmem>>, %arg4: memref<128x128xbf16, #tpu.memory_space<vmem>>, %arg5: memref<1x128x128xbf16, #tpu.memory_space<vmem>>, %arg6: memref<1x128x128xbf16, #tpu.memory_space<vmem>>, %arg7: memref<1x128x128xbf16, #tpu.memory_space<vmem>>, %arg8: memref<1x8x128xf32, #tpu.memory_space<vmem>>, %arg9: memref<128x128xf32, #tpu.memory_space<vmem>>) attributes {dimension_semantics = [#tpu.dimension_semantics<arbitrary>], iteration_bounds = array<i64: 2>, scalar_prefetch = 0 : i64, scratch_operands = 0 : i64, tpu.core_type = #tpu.core_type<tc>, window_params = [{pipeline_mode = #tpu.pipeline_mode<synchronous>, transform_indices = @transform_0, window_bounds = array<i64: 128, 128>}, {pipeline_mode = #tpu.pipeline_mode<synchronous>, transform_indices = @transform_1, window_bounds = array<i64: 128, 1>}, {pipeline_mode = #tpu.pipeline_mode<synchronous>, transform_indices = @transform_2, window_bounds = array<i64: 1, 128>}, {pipeline_mode = #tpu.pipeline_mode<synchronous>, transform_indices = @transform_3, window_bounds = array<i64: 128, 128>}, {transform_indices = @transform_4, window_bounds = array<i64: 1, 128, 128>}, {transform_indices = @transform_5, window_bounds = array<i64: 1, 128, 128>}, {transform_indices = @transform_6, window_bounds = array<i64: 1, 128, 128>}, {transform_indices = @transform_7, window_bounds = array<i64: 1, 8, 128>}, {pipeline_mode = #tpu.pipeline_mode<synchronous>, transform_indices = @transform_8, window_bounds = array<i64: 128, 128>}]} {
    %c0_i32 = arith.constant 0 : i32
    %0 = arith.cmpi eq, %arg0, %c0_i32 : i32
    %1 = arith.extui %0 : i1 to i32
    %c0_i32_0 = arith.constant 0 : i32
    %2 = arith.cmpi ne, %1, %c0_i32_0 : i32
    scf.if %2 {
      %c0_31 = arith.constant 0 : index
      %c0_32 = arith.constant 0 : index
      %62 = vector.load %arg1[%c0_31, %c0_32] : memref<128x128xf32, #tpu.memory_space<vmem>>, vector<128x128xf32>
      %c0_33 = arith.constant 0 : index
      %c0_34 = arith.constant 0 : index
      %63 = vector.load %arg9[%c0_33, %c0_34] : memref<128x128xf32, #tpu.memory_space<vmem>>, vector<128x128xf32>
      tpu.vector_store %arg9[%c0_33, %c0_34], %62 {strides = array<i32>} : memref<128x128xf32, #tpu.memory_space<vmem>>, vector<128x128xf32>,
    } else {
    }
    %c0 = arith.constant 0 : index
    %c0_1 = arith.constant 0 : index
    %3 = vector.load %arg9[%c0, %c0_1] : memref<128x128xf32, #tpu.memory_space<vmem>>, vector<128x128xf32>
    %4 = arith.truncf %3 : vector<128x128xf32> to vector<128x128xbf16>
    %c0_2 = arith.constant 0 : index
    %c0_3 = arith.constant 0 : index
    %5 = vector.load %arg4[%c0_2, %c0_3] : memref<128x128xbf16, #tpu.memory_space<vmem>>, vector<128x128xbf16>
    %c0_4 = arith.constant 0 : index
    %c0_5 = arith.constant 0 : index
    %c0_6 = arith.constant 0 : index
    %6 = vector.load %arg5[%c0_4, %c0_5, %c0_6] : memref<1x128x128xbf16, #tpu.memory_space<vmem>>, vector<1x128x128xbf16>
    %7 = vector.shape_cast %6 : vector<1x128x128xbf16> to vector<128x128xbf16>
    %cst = arith.constant dense<0.000000e+00> : vector<128x128xf32>
    %8 = tpu.matmul %5, %7, %cst {dimension_numbers = #tpu.dot_dimension_numbers<[1], [0], [0], [1], [0, 0, 1, 1], [], []>} : vector<128x128xbf16>, vector<128x128xbf16>, vector<128x128xf32> -> vector<128x128xf32>
    %9 = tpu.iota {dimensions = array<i32: 1>} : vector<128x128xi32>
    %c0_7 = arith.constant 0 : index
    %c0_8 = arith.constant 0 : index
    %10 = vector.load %arg2[%c0_7, %c0_8] : memref<128x1xi32, #tpu.memory_space<vmem>>, vector<128x1xi32>
    %11 = vector.broadcast %10 : vector<128x1xi32> to vector<128x128xi32>
    %12 = arith.cmpi eq, %9, %11 : vector<128x128xi32>
    %13 = arith.extui %12 : vector<128x128xi1> to vector<128x128xi32>
    %14 = arith.sitofp %13 : vector<128x128xi32> to vector<128x128xf32>
    %15 = arith.truncf %14 : vector<128x128xf32> to vector<128x128xbf16>
    %cst_9 = arith.constant dense<0.000000e+00> : vector<128x128xf32>
    %16 = tpu.matmul %15, %4, %cst_9 {dimension_numbers = #tpu.dot_dimension_numbers<[1], [0], [0], [1], [0, 0, 1, 1], [], []>} : vector<128x128xbf16>, vector<128x128xbf16>, vector<128x128xf32> -> vector<128x128xf32>
    %17 = arith.addf %16, %8 : vector<128x128xf32>
    %cst_10 = arith.constant 0.000000e+00 : f32
    %18 = vector.broadcast %cst_10 : f32 to vector<128x128xf32>
    %19 = arith.maximumf %17, %18 : vector<128x128xf32>
    %20 = arith.truncf %19 : vector<128x128xf32> to vector<128x128xbf16>
    %21 = tpu.iota {dimensions = array<i32: 0>} : vector<128x128xi32>
    %c0_11 = arith.constant 0 : index
    %c0_12 = arith.constant 0 : index
    %22 = vector.load %arg3[%c0_11, %c0_12] : memref<1x128xi32, #tpu.memory_space<vmem>>, vector<1x128xi32>
    %23 = vector.broadcast %22 : vector<1x128xi32> to vector<128x128xi32>
    %24 = arith.cmpi eq, %21, %23 : vector<128x128xi32>
    %25 = arith.extui %24 : vector<128x128xi1> to vector<128x128xi32>
    %26 = arith.sitofp %25 : vector<128x128xi32> to vector<128x128xf32>
    %27 = arith.truncf %26 : vector<128x128xf32> to vector<128x128xbf16>
    %cst_13 = arith.constant dense<0.000000e+00> : vector<128x128xf32>
    %28 = tpu.matmul %27, %20, %cst_13 {dimension_numbers = #tpu.dot_dimension_numbers<[1], [0], [0], [1], [0, 0, 1, 1], [], []>} : vector<128x128xbf16>, vector<128x128xbf16>, vector<128x128xf32> -> vector<128x128xf32>
    %c0_14 = arith.constant 0 : index
    %c0_15 = arith.constant 0 : index
    %c0_16 = arith.constant 0 : index
    %29 = vector.load %arg8[%c0_14, %c0_15, %c0_16] : memref<1x8x128xf32, #tpu.memory_space<vmem>>, vector<1x8x128xf32>
    %30 = vector.shape_cast %29 : vector<1x8x128xf32> to vector<8x128xf32>
    %31 = vector.extract_strided_slice %30 {offsets = [0, 0], sizes = [1, 128], strides = [1, 1]} : vector<8x128xf32> to vector<1x128xf32>
    %32 = vector.extract_strided_slice %30 {offsets = [1, 0], sizes = [1, 128], strides = [1, 1]} : vector<8x128xf32> to vector<1x128xf32>
    %33 = vector.extract_strided_slice %30 {offsets = [2, 0], sizes = [1, 128], strides = [1, 1]} : vector<8x128xf32> to vector<1x128xf32>
    %cst_17 = arith.constant 1.000000e+00 : f32
    %34 = vector.broadcast %cst_17 : f32 to vector<1x128xf32>
    %35 = arith.addf %34, %33 : vector<1x128xf32>
    %36 = vector.broadcast %35 : vector<1x128xf32> to vector<128x128xf32>
    %37 = arith.mulf %36, %3 : vector<128x128xf32>
    %38 = arith.addf %37, %28 : vector<128x128xf32>
    %39 = arith.truncf %38 : vector<128x128xf32> to vector<128x128xbf16>
    %c0_18 = arith.constant 0 : index
    %c0_19 = arith.constant 0 : index
    %c0_20 = arith.constant 0 : index
    %40 = vector.load %arg6[%c0_18, %c0_19, %c0_20] : memref<1x128x128xbf16, #tpu.memory_space<vmem>>, vector<1x128x128xbf16>
    %41 = vector.shape_cast %40 : vector<1x128x128xbf16> to vector<128x128xbf16>
    %cst_21 = arith.constant dense<0.000000e+00> : vector<128x128xf32>
    %42 = tpu.matmul %39, %41, %cst_21 {dimension_numbers = #tpu.dot_dimension_numbers<[1], [0], [0], [1], [0, 0, 1, 1], [], []>} : vector<128x128xbf16>, vector<128x128xbf16>, vector<128x128xf32> -> vector<128x128xf32>
    %43 = vector.broadcast %31 : vector<1x128xf32> to vector<128x128xf32>
    %44 = arith.addf %42, %43 : vector<128x128xf32>
    %cst_22 = arith.constant 0.000000e+00 : f32
    %45 = vector.broadcast %cst_22 : f32 to vector<128x128xf32>
    %46 = arith.maximumf %44, %45 : vector<128x128xf32>
    %47 = arith.truncf %46 : vector<128x128xf32> to vector<128x128xbf16>
    %c0_23 = arith.constant 0 : index
    %c0_24 = arith.constant 0 : index
    %c0_25 = arith.constant 0 : index
    %48 = vector.load %arg7[%c0_23, %c0_24, %c0_25] : memref<1x128x128xbf16, #tpu.memory_space<vmem>>, vector<1x128x128xbf16>
    %49 = vector.shape_cast %48 : vector<1x128x128xbf16> to vector<128x128xbf16>
    %cst_26 = arith.constant dense<0.000000e+00> : vector<128x128xf32>
    %50 = tpu.matmul %47, %49, %cst_26 {dimension_numbers = #tpu.dot_dimension_numbers<[1], [0], [0], [1], [0, 0, 1, 1], [], []>} : vector<128x128xbf16>, vector<128x128xbf16>, vector<128x128xf32> -> vector<128x128xf32>
    %51 = vector.broadcast %32 : vector<1x128xf32> to vector<128x128xf32>
    %52 = arith.addf %50, %51 : vector<128x128xf32>
    %c1_i32 = arith.constant 1 : i32
    %53 = arith.cmpi eq, %arg0, %c1_i32 : i32
    %cst_27 = arith.constant 0.000000e+00 : f32
    %54 = vector.broadcast %cst_27 : f32 to vector<128x128xf32>
    %55 = arith.cmpf ogt, %52, %54 : vector<128x128xf32>
    %56 = vector.broadcast %53 : i1 to vector<128x128xi1>
    %57 = arith.ori %56, %55 : vector<128x128xi1>
    %cst_28 = arith.constant 0.000000e+00 : f32
    %58 = vector.broadcast %cst_28 : f32 to vector<128x128xf32>
    %59 = arith.select %57, %52, %58 : vector<128x128xi1>, vector<128x128xf32>
    %60 = arith.addf %59, %3 : vector<128x128xf32>
    %c0_29 = arith.constant 0 : index
    %c0_30 = arith.constant 0 : index
    %61 = vector.load %arg9[%c0_29, %c0_30] : memref<128x128xf32, #tpu.memory_space<vmem>>, vector<128x128xf32>
    tpu.vector_store %arg9[%c0_29, %c0_30], %60 {strides = array<i32>} : memref<128x128xf32, #tpu.memory_space<vmem>>, vector<128x128xf32>,
    return
  }
  func.func @transform_0(%arg0: i32) -> (i32, i32) {
    %c0_i32 = arith.constant 0 : i32
    %c0_i32_0 = arith.constant 0 : i32
    %c0_i32_1 = arith.constant 0 : i32
    return %c0_i32, %c0_i32_0 : i32, i32
  }
  func.func @transform_1(%arg0: i32) -> (i32, i32) {
    %c0_i32 = arith.constant 0 : i32
    %c0_i32_0 = arith.constant 0 : i32
    %c0_i32_1 = arith.constant 0 : i32
    return %c0_i32, %c0_i32_0 : i32, i32
  }
  func.func @transform_2(%arg0: i32) -> (i32, i32) {
    %c0_i32 = arith.constant 0 : i32
    %c0_i32_0 = arith.constant 0 : i32
    %c0_i32_1 = arith.constant 0 : i32
    return %c0_i32, %c0_i32_0 : i32, i32
  }
  func.func @transform_3(%arg0: i32) -> (i32, i32) {
    %c0_i32 = arith.constant 0 : i32
    %c0_i32_0 = arith.constant 0 : i32
    %c0_i32_1 = arith.constant 0 : i32
    return %c0_i32, %c0_i32_0 : i32, i32
  }
  func.func @transform_4(%arg0: i32) -> (i32, i32, i32) {
    %c0_i32 = arith.constant 0 : i32
    %c0_i32_0 = arith.constant 0 : i32
    %c0_i32_1 = arith.constant 0 : i32
    return %arg0, %c0_i32, %c0_i32_0 : i32, i32, i32
  }
  func.func @transform_5(%arg0: i32) -> (i32, i32, i32) {
    %c0_i32 = arith.constant 0 : i32
    %c0_i32_0 = arith.constant 0 : i32
    %c0_i32_1 = arith.constant 0 : i32
    return %arg0, %c0_i32, %c0_i32_0 : i32, i32, i32
  }
  func.func @transform_6(%arg0: i32) -> (i32, i32, i32) {
    %c0_i32 = arith.constant 0 : i32
    %c0_i32_0 = arith.constant 0 : i32
    %c0_i32_1 = arith.constant 0 : i32
    return %arg0, %c0_i32, %c0_i32_0 : i32, i32, i32
  }
  func.func @transform_7(%arg0: i32) -> (i32, i32, i32) {
    %c0_i32 = arith.constant 0 : i32
    %c0_i32_0 = arith.constant 0 : i32
    %c0_i32_1 = arith.constant 0 : i32
    return %arg0, %c0_i32, %c0_i32_0 : i32, i32, i32
  }
  func.func @transform_8(%arg0: i32) -> (i32, i32) {
    %c0_i32 = arith.constant 0 : i32
    %c0_i32_0 = arith.constant 0 : i32
    %c0_i32_1 = arith.constant 0 : i32
    return %c0_i32, %c0_i32_0 : i32, i32
  }
}

</mosaic_0001>

<llo_original>
// kernel: tpu_custom_call.1
$region0: #{tpu_custom_call.1}
  #allocation0 [shape = 'u32[]', space=smem, size = 0x4, offset = 0x4, fixed_abs, tag = 'smem constant byte address 0x4 - core index']
  #allocation1 [shape = 'u32[144,128]{1,0:T(1,128)}', space=vmem, size = 0x12000, scoped, tag = 'internal scratch']
  %s0 = inlined_call_operand.vmem [shape: f32[128,128], index: 0, kind: input, shape index: {}]
  %s1 = inlined_call_operand.vmem [shape: s32[128,1], index: 1, kind: input, shape index: {}]
  %s2 = inlined_call_operand.hbm [shape: s32[1,128], index: 2, kind: input, shape index: {}]
  %s3 = inlined_call_operand.hbm [shape: bf16[128,128], index: 3, kind: input, shape index: {}]
  %s4 = inlined_call_operand.hbm [shape: bf16[2,128,128], index: 4, kind: input, shape index: {}]
  %s5 = inlined_call_operand.hbm [shape: bf16[2,128,128], index: 5, kind: input, shape index: {}]
  %s6 = inlined_call_operand.hbm [shape: bf16[2,128,128], index: 6, kind: input, shape index: {}]
  %s7 = inlined_call_operand.vmem [shape: f32[2,8,128], index: 7, kind: input, shape index: {}]
  %s8 = inlined_call_operand.hbm [shape: f32[128,128], index: 8, kind: output, shape index: {}]
  %s9 = sld [smem:[#allocation0]]
  $region89: #{tpu_custom_call.1} parent=0
    _
  %s11 = ssub.s32 1, %s9
  %s12 = scalar_select 0, %s11, %s9
  $region1: #{tpu_custom_call.1} parent=0
    #allocation2 [shape = 'u8[512]{0}', space=vmem, size = 0x400, scoped, tag = 'input window, operand 2, single buffered']
    #allocation3 [shape = 's32[2]{0}', space=sflag, size = 0x8, scoped, tag = 'scoped memory for tpu_custom_call.1']
    #allocation4 [shape = 's32[2]{0}', space=sflag, size = 0x8, scoped, tag = 'scoped memory for tpu_custom_call.1']
    #allocation5 [shape = 'u8[32768]{0}', space=vmem, size = 0x8000, scoped, tag = 'input window, operand 3, single buffered']
    #allocation6 [shape = 's32[1]{0}', space=sflag, size = 0x4, scoped, tag = 'scoped memory for tpu_custom_call.1']
    #allocation7 [shape = 'u8[65536]{0}', space=vmem, size = 0x10000, scoped, tag = 'input window, operand 4']
    #allocation8 [shape = 'u8[65536]{0}', space=vmem, size = 0x10000, scoped, tag = 'input window, operand 5']
    #allocation9 [shape = 'u8[65536]{0}', space=vmem, size = 0x10000, scoped, tag = 'input window, operand 6']
    #allocation10 [shape = 'u8[65536]{0}', space=vmem, size = 0x10000, scoped, tag = 'output window, operand 0, single buffered']
    %13 = vsyncpa [#allocation3], 0
    %14 = vsyncpa [#allocation6], 0
    %15 = vsyncpa [#allocation4], 0
    loop: start=0, step=1, limit=4
    $region2: #{tpu_custom_call.1} parent=1 // loop_pre_header
      _
    $region3: #{tpu_custom_call.1} parent=1 // loop_header
      %s17 = sphi 0, %s21
      %p18 = scmp.ge.s32.totalorder %s17, 4
      %s25 = sphi 0, %s25
      %s27 = sphi 0, %s25
      %s28 = sphi 0, %s27
      %s42 = sphi 0, %s28
      %s46 = sphi 0, %s46
      %s48 = sphi 0, %s46
      %s49 = sphi 0, %s48
      %s63 = sphi 0, %s49
      %s67 = sphi 0, %s67
      %s69 = sphi 0, %s67
      %s70 = sphi 0, %s69
      %s84 = sphi 0, %s70
      %s88 = sphi 0, %s88
      %s90 = sphi 0, %s88
      %s91 = sphi 0, %s90
      %s105 = sphi 0, %s91
      %s111 = sphi 0, %s113
      %s114 = sphi 0, %s111
      %s115 = sphi 0, %s114
      %s131 = sphi 0, %s115
      %s137 = sphi 0, %s139
      %s140 = sphi 0, %s137
      %s141 = sphi 0, %s140
      %s157 = sphi 0, %s141
      %s163 = sphi 0, %s165
      %s166 = sphi 0, %s163
      %s167 = sphi 0, %s166
      %s183 = sphi 0, %s167
      %s189 = sphi 0, %s191
      %s192 = sphi 0, %s189
      %s193 = sphi 0, %s192
      %s209 = sphi 0, %s193
      %s213 = sphi 0, %s213
      %s215 = sphi 0, %s213
      %s216 = sphi 0, %s215
      %s230 = sphi 0, %s216
    $region4: #{tpu_custom_call.1} parent=1 // loop_header_branch
      %20 = sbr.rel (%p18) target = $region8
    $region5: #{tpu_custom_call.1} parent=1 // loop_body
      %s22 = ssub.s32 %s17, 1
      %s23 = ssub.s32 %s17, 2
      %s24 = sadd.s32 %s17, 1
      %s26 = sadd.s32 %s25, 1
      %p29 = scmp.eq.s32.totalorder %s17, 1
      %p30 = scmp.ne.s32.totalorder %s25, %s27
      %p31 = scmp.eq.s32.totalorder %s17, 0
      %p32 = por %p30, %p31
      %p33 = scmp.ne.s32.totalorder %s25, %s27
      %p34 = scmp.eq.s32.totalorder %s22, 1
      %p35 = por %p33, %p34
      %p36 = scmp.ne.s32.totalorder %s27, %s28
      %p37 = scmp.eq.s32.totalorder %s22, 0
      %p38 = por %p36, %p37
      %p39 = scmp.ne.s32.totalorder %s27, %s28
      %p40 = scmp.eq.s32.totalorder %s23, 1
      %p41 = por %p39, %p40
      %p43 = scmp.ne.s32.totalorder %s28, %s42
      %p44 = scmp.eq.s32.totalorder %s23, 0
      %p45 = por %p43, %p44
      %s47 = sadd.s32 %s46, 1
      %p50 = scmp.eq.s32.totalorder %s17, 1
      %p51 = scmp.ne.s32.totalorder %s46, %s48
      %p52 = scmp.eq.s32.totalorder %s17, 0
      %p53 = por %p51, %p52
      %p54 = scmp.ne.s32.totalorder %s46, %s48
      %p55 = scmp.eq.s32.totalorder %s22, 1
      %p56 = por %p54, %p55
      %p57 = scmp.ne.s32.totalorder %s48, %s49
      %p58 = scmp.eq.s32.totalorder %s22, 0
      %p59 = por %p57, %p58
      %p60 = scmp.ne.s32.totalorder %s48, %s49
      %p61 = scmp.eq.s32.totalorder %s23, 1
      %p62 = por %p60, %p61
      %p64 = scmp.ne.s32.totalorder %s49, %s63
      %p65 = scmp.eq.s32.totalorder %s23, 0
      %p66 = por %p64, %p65
      %s68 = sadd.s32 %s67, 1
      %p71 = scmp.eq.s32.totalorder %s17, 1
      %p72 = scmp.ne.s32.totalorder %s67, %s69
      %p73 = scmp.eq.s32.totalorder %s17, 0
      %p74 = por %p72, %p73
      %p75 = scmp.ne.s32.totalorder %s67, %s69
      %p76 = scmp.eq.s32.totalorder %s22, 1
      %p77 = por %p75, %p76
      %p78 = scmp.ne.s32.totalorder %s69, %s70
      %p79 = scmp.eq.s32.totalorder %s22, 0
      %p80 = por %p78, %p79
      %p81 = scmp.ne.s32.totalorder %s69, %s70
      %p82 = scmp.eq.s32.totalorder %s23, 1
      %p83 = por %p81, %p82
      %p85 = scmp.ne.s32.totalorder %s70, %s84
      %p86 = scmp.eq.s32.totalorder %s23, 0
      %p87 = por %p85, %p86
      %s89 = sadd.s32 %s88, 1
      %p92 = scmp.eq.s32.totalorder %s17, 1
      %p93 = scmp.ne.s32.totalorder %s88, %s90
      %p94 = scmp.eq.s32.totalorder %s17, 0
      %p95 = por %p93, %p94
      %p96 = scmp.ne.s32.totalorder %s88, %s90
      %p97 = scmp.eq.s32.totalorder %s22, 1
      %p98 = por %p96, %p97
      %p99 = scmp.ne.s32.totalorder %s90, %s91
      %p100 = scmp.eq.s32.totalorder %s22, 0
      %p101 = por %p99, %p100
      %p102 = scmp.ne.s32.totalorder %s90, %s91
      %p103 = scmp.eq.s32.totalorder %s23, 1
      %p104 = por %p102, %p103
      %p106 = scmp.ne.s32.totalorder %s91, %s105
      %p107 = scmp.eq.s32.totalorder %s23, 0
      %p108 = por %p106, %p107
      %s109 = ssub.s32 %s17, %s24
      %p110 = scmp.eq.s32.totalorder %s109, 0
      %s112 = sadd.s32 %s111, 1
      %s113 = scalar_select %p110, %s111, %s112
      %p116 = pneg %p110
      %p117 = scmp.eq.s32.totalorder %s17, 1
      %p118 = por %p116, %p117
      %p119 = scmp.ne.s32.totalorder %s111, %s114
      %p120 = scmp.eq.s32.totalorder %s17, 0
      %p121 = por %p119, %p120
      %p122 = scmp.ne.s32.totalorder %s111, %s114
      %p123 = scmp.eq.s32.totalorder %s22, 1
      %p124 = por %p122, %p123
      %p125 = scmp.ne.s32.totalorder %s114, %s115
      %p126 = scmp.eq.s32.totalorder %s22, 0
      %p127 = por %p125, %p126
      %p128 = scmp.ne.s32.totalorder %s114, %s115
      %p129 = scmp.eq.s32.totalorder %s23, 1
      %p130 = por %p128, %p129
      %p132 = scmp.ne.s32.totalorder %s115, %s131
      %p133 = scmp.eq.s32.totalorder %s23, 0
      %p134 = por %p132, %p133
      %s135 = ssub.s32 %s17, %s24
      %p136 = scmp.eq.s32.totalorder %s135, 0
      %s138 = sadd.s32 %s137, 1
      %s139 = scalar_select %p136, %s137, %s138
      %p142 = pneg %p136
      %p143 = scmp.eq.s32.totalorder %s17, 1
      %p144 = por %p142, %p143
      %p145 = scmp.ne.s32.totalorder %s137, %s140
      %p146 = scmp.eq.s32.totalorder %s17, 0
      %p147 = por %p145, %p146
      %p148 = scmp.ne.s32.totalorder %s137, %s140
      %p149 = scmp.eq.s32.totalorder %s22, 1
      %p150 = por %p148, %p149
      %p151 = scmp.ne.s32.totalorder %s140, %s141
      %p152 = scmp.eq.s32.totalorder %s22, 0
      %p153 = por %p151, %p152
      %p154 = scmp.ne.s32.totalorder %s140, %s141
      %p155 = scmp.eq.s32.totalorder %s23, 1
      %p156 = por %p154, %p155
      %p158 = scmp.ne.s32.totalorder %s141, %s157
      %p159 = scmp.eq.s32.totalorder %s23, 0
      %p160 = por %p158, %p159
      %s161 = ssub.s32 %s17, %s24
      %p162 = scmp.eq.s32.totalorder %s161, 0
      %s164 = sadd.s32 %s163, 1
      %s165 = scalar_select %p162, %s163, %s164
      %p168 = pneg %p162
      %p169 = scmp.eq.s32.totalorder %s17, 1
      %p170 = por %p168, %p169
      %p171 = scmp.ne.s32.totalorder %s163, %s166
      %p172 = scmp.eq.s32.totalorder %s17, 0
      %p173 = por %p171, %p172
      %p174 = scmp.ne.s32.totalorder %s163, %s166
      %p175 = scmp.eq.s32.totalorder %s22, 1
      %p176 = por %p174, %p175
      %p177 = scmp.ne.s32.totalorder %s166, %s167
      %p178 = scmp.eq.s32.totalorder %s22, 0
      %p179 = por %p177, %p178
      %p180 = scmp.ne.s32.totalorder %s166, %s167
      %p181 = scmp.eq.s32.totalorder %s23, 1
      %p182 = por %p180, %p181
      %p184 = scmp.ne.s32.totalorder %s167, %s183
      %p185 = scmp.eq.s32.totalorder %s23, 0
      %p186 = por %p184, %p185
      %s187 = ssub.s32 %s17, %s24
      %p188 = scmp.eq.s32.totalorder %s187, 0
      %s190 = sadd.s32 %s189, 1
      %s191 = scalar_select %p188, %s189, %s190
      %p194 = pneg %p188
      %p195 = scmp.eq.s32.totalorder %s17, 1
      %p196 = por %p194, %p195
      %p197 = scmp.ne.s32.totalorder %s189, %s192
      %p198 = scmp.eq.s32.totalorder %s17, 0
      %p199 = por %p197, %p198
      %p200 = scmp.ne.s32.totalorder %s189, %s192
      %p201 = scmp.eq.s32.totalorder %s22, 1
      %p202 = por %p200, %p201
      %p203 = scmp.ne.s32.totalorder %s192, %s193
      %p204 = scmp.eq.s32.totalorder %s22, 0
      %p205 = por %p203, %p204
      %p206 = scmp.ne.s32.totalorder %s192, %s193
      %p207 = scmp.eq.s32.totalorder %s23, 1
      %p208 = por %p206, %p207
      %p210 = scmp.ne.s32.totalorder %s193, %s209
      %p211 = scmp.eq.s32.totalorder %s23, 0
      %p212 = por %p210, %p211
      %s214 = sadd.s32 %s213, 1
      %p217 = scmp.eq.s32.totalorder %s17, 1
      %p218 = scmp.ne.s32.totalorder %s213, %s215
      %p219 = scmp.eq.s32.totalorder %s17, 0
      %p220 = por %p218, %p219
      %p221 = scmp.ne.s32.totalorder %s213, %s215
      %p222 = scmp.eq.s32.totalorder %s22, 1
      %p223 = por %p221, %p222
      %p224 = scmp.ne.s32.totalorder %s215, %s216
      %p225 = scmp.eq.s32.totalorder %s22, 0
      %p226 = por %p224, %p225
      %p227 = scmp.ne.s32.totalorder %s215, %s216
      %p228 = scmp.eq.s32.totalorder %s23, 1
      %p229 = por %p227, %p228
      %p231 = scmp.ne.s32.totalorder %s216, %s230
      %p232 = scmp.eq.s32.totalorder %s23, 0
      %p233 = por %p231, %p232
      %p234 = scmp.le.s32.totalorder 1, %s17
      %p235 = scmp.lt.s32.totalorder %s17, 3
      %p236 = pnand %p234, %p235
      %p237 = pneg %p236
      // Predicated region
      $region9: #{tpu_custom_call.1} parent=5 // pred_check
        _
      $region10: #{tpu_custom_call.1} parent=5 // pred_check_branch
        %239 = sbr.rel (%p236) target = $region12
      $region11: #{tpu_custom_call.1} parent=5 // pred_region
        %s240 = ssub.s32 %s17, 1
        // Predicated region
        $region13: #{tpu_custom_call.1} parent=11 // pred_check
          %p241 = pneg %p38
        $region14: #{tpu_custom_call.1} parent=11 // pred_check_branch
          %243 = sbr.rel (%p241) target = $region16
        $region15: #{tpu_custom_call.1} parent=11 // pred_region
          _
        $region16: #{tpu_custom_call.1} parent=11 // pred_fallthru
          _
        // Predicated region
        $region17: #{tpu_custom_call.1} parent=11 // pred_check
          %p244 = pneg %p59
        $region18: #{tpu_custom_call.1} parent=11 // pred_check_branch
          %246 = sbr.rel (%p244) target = $region20
        $region19: #{tpu_custom_call.1} parent=11 // pred_region
          _
        $region20: #{tpu_custom_call.1} parent=11 // pred_fallthru
          _
        // Predicated region
        $region21: #{tpu_custom_call.1} parent=11 // pred_check
          %p247 = pneg %p80
        $region22: #{tpu_custom_call.1} parent=11 // pred_check_branch
          %249 = sbr.rel (%p247) target = $region24
        $region23: #{tpu_custom_call.1} parent=11 // pred_region
          %s251 = ssub.s32 16, 16
          %252 = vsyncadd [#allocation3], %s251
          %s254 = sshll.u32 [#allocation2], 4
          %s255 = int_to_ptr.vmem [resolvable:$true] %s254
          %257 = dma.hbm_to_vmem [thread:$0]  %s2, 16, %s255, [#allocation3]
        $region24: #{tpu_custom_call.1} parent=11 // pred_fallthru
          _
        // Predicated region
        $region25: #{tpu_custom_call.1} parent=11 // pred_check
          %p258 = pneg %p101
        $region26: #{tpu_custom_call.1} parent=11 // pred_check_branch
          %260 = sbr.rel (%p258) target = $region28
        $region27: #{tpu_custom_call.1} parent=11 // pred_region
          %s262 = ssub.s32 1024, 1024
          %263 = vsyncadd [#allocation6], %s262
          %s264 = sshll.u32 [#allocation5], 4
          %s265 = int_to_ptr.vmem [resolvable:$true] %s264
          %270 = dma.hbm_to_vmem [thread:$0]  %s3, 1024, %s265, [#allocation6], 64, 64, 4
        $region28: #{tpu_custom_call.1} parent=11 // pred_fallthru
          _
      $region12: #{tpu_custom_call.1} parent=5 // pred_fallthru
        _
      %p271 = scmp.lt.s32.totalorder %s17, 2
      // Predicated region
      $region29: #{tpu_custom_call.1} parent=5 // pred_check
        %p272 = pneg %p271
      $region30: #{tpu_custom_call.1} parent=5 // pred_check_branch
        %274 = sbr.rel (%p272) target = $region32
      $region31: #{tpu_custom_call.1} parent=5 // pred_region
        // Predicated region
        $region33: #{tpu_custom_call.1} parent=31 // pred_check
          %p275 = pneg %p121
        $region34: #{tpu_custom_call.1} parent=31 // pred_check_branch
          %277 = sbr.rel (%p275) target = $region36
        $region35: #{tpu_custom_call.1} parent=31 // pred_region
          %s278 = sand.u32 %s17, 1
          %s279 = scalar_lea.sflag [#allocation3], %s278
          %s280 = sand.u32 %s111, 1
          %s281 = smul.addr %s280, 64
          %s282 = scalar_lea.vmem [#allocation7], %s281
          %s284 = ssub.s32 1024, 1024
          %285 = vsyncadd %s279, %s284
          %s286 = smul.addr %s17, 16
          %s287 = smul.addr %s286, 64
          %s288 = scalar_lea.hbm %s4, %s287
          %s289 = sshll.u32 %s282, 4
          %s290 = int_to_ptr.vmem [resolvable:$true] %s289
          %295 = dma.hbm_to_vmem [thread:$0]  %s288, 1024, %s290, %s279, 64, 64, 4
        $region36: #{tpu_custom_call.1} parent=31 // pred_fallthru
          _
        // Predicated region
        $region37: #{tpu_custom_call.1} parent=31 // pred_check
          %p296 = pneg %p147
        $region38: #{tpu_custom_call.1} parent=31 // pred_check_branch
          %298 = sbr.rel (%p296) target = $region40
        $region39: #{tpu_custom_call.1} parent=31 // pred_region
          %s299 = sand.u32 %s17, 1
          %s300 = scalar_lea.sflag [#allocation3], %s299
          %s301 = sand.u32 %s137, 1
          %s302 = smul.addr %s301, 64
          %s303 = scalar_lea.vmem [#allocation8], %s302
          %s305 = ssub.s32 1024, 1024
          %306 = vsyncadd %s300, %s305
          %s307 = smul.addr %s17, 16
          %s308 = smul.addr %s307, 64
          %s309 = scalar_lea.hbm %s5, %s308
          %s310 = sshll.u32 %s303, 4
          %s311 = int_to_ptr.vmem [resolvable:$true] %s310
          %316 = dma.hbm_to_vmem [thread:$0]  %s309, 1024, %s311, %s300, 64, 64, 4
        $region40: #{tpu_custom_call.1} parent=31 // pred_fallthru
          _
        // Predicated region
        $region41: #{tpu_custom_call.1} parent=31 // pred_check
          %p317 = pneg %p173
        $region42: #{tpu_custom_call.1} parent=31 // pred_check_branch
          %319 = sbr.rel (%p317) target = $region44
        $region43: #{tpu_custom_call.1} parent=31 // pred_region
          %s320 = sand.u32 %s17, 1
          %s321 = scalar_lea.sflag [#allocation3], %s320
          %s322 = sand.u32 %s163, 1
          %s323 = smul.addr %s322, 64
          %s324 = scalar_lea.vmem [#allocation9], %s323
          %s326 = ssub.s32 1024, 1024
          %327 = vsyncadd %s321, %s326
          %s328 = smul.addr %s17, 16
          %s329 = smul.addr %s328, 64
          %s330 = scalar_lea.hbm %s6, %s329
          %s331 = sshll.u32 %s324, 4
          %s332 = int_to_ptr.vmem [resolvable:$true] %s331
          %337 = dma.hbm_to_vmem [thread:$0]  %s330, 1024, %s332, %s321, 64, 64, 4
        $region44: #{tpu_custom_call.1} parent=31 // pred_fallthru
          _
        // Predicated region
        $region45: #{tpu_custom_call.1} parent=31 // pred_check
          %p338 = pneg %p199
        $region46: #{tpu_custom_call.1} parent=31 // pred_check_branch
          %340 = sbr.rel (%p338) target = $region48
        $region47: #{tpu_custom_call.1} parent=31 // pred_region
          %p341 = scmp.lt.s32.totalorder %s17, 1
          %s342 = scalar_select %p341, %s17, 1
          %s343 = smul.addr %s342, 8
          %s344 = scalar_lea.vmem %s7, %s343
        $region48: #{tpu_custom_call.1} parent=31 // pred_fallthru
          _
      $region32: #{tpu_custom_call.1} parent=5 // pred_fallthru
        _
      %p345 = scmp.le.s32.totalorder 1, %s17
      %p346 = scmp.lt.s32.totalorder %s17, 3
      %p347 = pnand %p345, %p346
      %p348 = pneg %p347
      // Predicated region
      $region49: #{tpu_custom_call.1} parent=5 // pred_check
        _
      $region50: #{tpu_custom_call.1} parent=5 // pred_check_branch
        %350 = sbr.rel (%p347) target = $region52
      $region51: #{tpu_custom_call.1} parent=5 // pred_region
        %s351 = ssub.s32 %s17, 1
        // Predicated region
        $region53: #{tpu_custom_call.1} parent=51 // pred_check
          %p352 = pneg %p80
        $region54: #{tpu_custom_call.1} parent=51 // pred_check_branch
          %354 = sbr.rel (%p352) target = $region56
        $region55: #{tpu_custom_call.1} parent=51 // pred_region
          %355 = dma.done [#allocation3], 16
        $region56: #{tpu_custom_call.1} parent=51 // pred_fallthru
          _
        // Predicated region
        $region57: #{tpu_custom_call.1} parent=51 // pred_check
          %p356 = pneg %p101
        $region58: #{tpu_custom_call.1} parent=51 // pred_check_branch
          %358 = sbr.rel (%p356) target = $region60
        $region59: #{tpu_custom_call.1} parent=51 // pred_region
          %359 = dma.done [#allocation6], 1024
        $region60: #{tpu_custom_call.1} parent=51 // pred_fallthru
          _
        %s360 = sand.u32 %s22, 1
        %s361 = scalar_lea.sflag [#allocation3], %s360
        %s362 = sand.u32 %s114, 1
        %s363 = smul.addr %s362, 64
        %s364 = scalar_lea.vmem [#allocation7], %s363
        // Predicated region
        $region61: #{tpu_custom_call.1} parent=51 // pred_check
          %p365 = pneg %p127
        $region62: #{tpu_custom_call.1} parent=51 // pred_check_branch
          %367 = sbr.rel (%p365) target = $region64
        $region63: #{tpu_custom_call.1} parent=51 // pred_region
          %368 = dma.done %s361, 1024
        $region64: #{tpu_custom_call.1} parent=51 // pred_fallthru
          _
        %s369 = sand.u32 %s22, 1
        %s370 = scalar_lea.sflag [#allocation3], %s369
        %s371 = sand.u32 %s140, 1
        %s372 = smul.addr %s371, 64
        %s373 = scalar_lea.vmem [#allocation8], %s372
        // Predicated region
        $region65: #{tpu_custom_call.1} parent=51 // pred_check
          %p374 = pneg %p153
        $region66: #{tpu_custom_call.1} parent=51 // pred_check_branch
          %376 = sbr.rel (%p374) target = $region68
        $region67: #{tpu_custom_call.1} parent=51 // pred_region
          %377 = dma.done %s370, 1024
        $region68: #{tpu_custom_call.1} parent=51 // pred_fallthru
          _
        %s378 = sand.u32 %s22, 1
        %s379 = scalar_lea.sflag [#allocation3], %s378
        %s380 = sand.u32 %s166, 1
        %s381 = smul.addr %s380, 64
        %s382 = scalar_lea.vmem [#allocation9], %s381
        // Predicated region
        $region69: #{tpu_custom_call.1} parent=51 // pred_check
          %p383 = pneg %p179
        $region70: #{tpu_custom_call.1} parent=51 // pred_check_branch
          %385 = sbr.rel (%p383) target = $region72
        $region71: #{tpu_custom_call.1} parent=51 // pred_region
          %386 = dma.done %s379, 1024
        $region72: #{tpu_custom_call.1} parent=51 // pred_fallthru
          _
        %p387 = pneg %p38
        %p388 = pneg %p35
        %p389 = pneg %p59
        %p390 = pneg %p56
        %p391 = pneg %p80
        %p392 = pneg %p77
        %p393 = pneg %p101
        %p394 = pneg %p98
        %s395 = sand.u32 %s22, 1
        %s396 = scalar_lea.sflag [#allocation3], %s395
        %s397 = sand.u32 %s114, 1
        %s398 = smul.addr %s397, 64
        %s399 = scalar_lea.vmem [#allocation7], %s398
        %p400 = pneg %p127
        %p401 = pneg %p124
        %s402 = sand.u32 %s22, 1
        %s403 = scalar_lea.sflag [#allocation3], %s402
        %s404 = sand.u32 %s140, 1
        %s405 = smul.addr %s404, 64
        %s406 = scalar_lea.vmem [#allocation8], %s405
        %p407 = pneg %p153
        %p408 = pneg %p150
        %s409 = sand.u32 %s22, 1
        %s410 = scalar_lea.sflag [#allocation3], %s409
        %s411 = sand.u32 %s166, 1
        %s412 = smul.addr %s411, 64
        %s413 = scalar_lea.vmem [#allocation9], %s412
        %p414 = pneg %p179
        %p415 = pneg %p176
        %p416 = scmp.lt.s32.totalorder %s22, 1
        %s417 = scalar_select %p416, %s22, 1
        %s418 = smul.addr %s417, 8
        %s419 = scalar_lea.vmem %s7, %s418
        %p420 = pneg %p205
        %p421 = pneg %p202
        %p422 = pneg %p226
        %p423 = pneg %p223
        %p424 = scmp.lt.s32.totalorder %s22, 1
        %s425 = scalar_select %p424, %s22, 1
        %s426 = smul.addr %s425, 8
        %s427 = scalar_lea.vmem %s7, %s426
        %p429 = scmp.eq.s32.totalorder %s22, 0
        // Predicated region
        $region73: #{tpu_custom_call.1} parent=51 // pred_check
          %p430 = pneg %p429
        $region74: #{tpu_custom_call.1} parent=51 // pred_check_branch
          %432 = sbr.rel (%p430) target = $region76
        $region75: #{tpu_custom_call.1} parent=51 // pred_region
          %v433 = vld [vmem:[%s0] sm:$0xff]
          %v434 = vld [vmem:[%s0 + $0x8] sm:$0xff]
          %v435 = vld [vmem:[%s0 + $0x10] sm:$0xff]
          %v436 = vld [vmem:[%s0 + $0x18] sm:$0xff]
          %v437 = vld [vmem:[%s0 + $0x20] sm:$0xff]
          %v438 = vld [vmem:[%s0 + $0x28] sm:$0xff]
          %v439 = vld [vmem:[%s0 + $0x30] sm:$0xff]
          %v440 = vld [vmem:[%s0 + $0x38] sm:$0xff]
          %v441 = vld [vmem:[%s0 + $0x40] sm:$0xff]
          %v442 = vld [vmem:[%s0 + $0x48] sm:$0xff]
          %v443 = vld [vmem:[%s0 + $0x50] sm:$0xff]
          %v444 = vld [vmem:[%s0 + $0x58] sm:$0xff]
          %v445 = vld [vmem:[%s0 + $0x60] sm:$0xff]
          %v446 = vld [vmem:[%s0 + $0x68] sm:$0xff]
          %v447 = vld [vmem:[%s0 + $0x70] sm:$0xff]
          %v448 = vld [vmem:[%s0 + $0x78] sm:$0xff]
          %449 = vst [vmem:[#allocation10] sm:$0xff] %v433
          %450 = vst [vmem:[#allocation10 + $0x8] sm:$0xff] %v434
          %451 = vst [vmem:[#allocation10 + $0x10] sm:$0xff] %v435
          %452 = vst [vmem:[#allocation10 + $0x18] sm:$0xff] %v436
          %453 = vst [vmem:[#allocation10 + $0x20] sm:$0xff] %v437
          %454 = vst [vmem:[#allocation10 + $0x28] sm:$0xff] %v438
          %455 = vst [vmem:[#allocation10 + $0x30] sm:$0xff] %v439
          %456 = vst [vmem:[#allocation10 + $0x38] sm:$0xff] %v440
          %457 = vst [vmem:[#allocation10 + $0x40] sm:$0xff] %v441
          %458 = vst [vmem:[#allocation10 + $0x48] sm:$0xff] %v442
          %459 = vst [vmem:[#allocation10 + $0x50] sm:$0xff] %v443
          %460 = vst [vmem:[#allocation10 + $0x58] sm:$0xff] %v444
          %461 = vst [vmem:[#allocation10 + $0x60] sm:$0xff] %v445
          %462 = vst [vmem:[#allocation10 + $0x68] sm:$0xff] %v446
          %463 = vst [vmem:[#allocation10 + $0x70] sm:$0xff] %v447
          %464 = vst [vmem:[#allocation10 + $0x78] sm:$0xff] %v448
        $region76: #{tpu_custom_call.1} parent=51 // pred_fallthru
          _
        %v465 = vld [vmem:[#allocation10] sm:$0xff]
        %v466 = vld [vmem:[#allocation10 + $0x8] sm:$0xff]
        %v467 = vld [vmem:[#allocation10 + $0x10] sm:$0xff]
        %v468 = vld [vmem:[#allocation10 + $0x18] sm:$0xff]
        %v469 = vld [vmem:[#allocation10 + $0x20] sm:$0xff]
        %v470 = vld [vmem:[#allocation10 + $0x28] sm:$0xff]
        %v471 = vld [vmem:[#allocation10 + $0x30] sm:$0xff]
        %v472 = vld [vmem:[#allocation10 + $0x38] sm:$0xff]
        %v473 = vld [vmem:[#allocation10 + $0x40] sm:$0xff]
        %v474 = vld [vmem:[#allocation10 + $0x48] sm:$0xff]
        %v475 = vld [vmem:[#allocation10 + $0x50] sm:$0xff]
        %v476 = vld [vmem:[#allocation10 + $0x58] sm:$0xff]
        %v477 = vld [vmem:[#allocation10 + $0x60] sm:$0xff]
        %v478 = vld [vmem:[#allocation10 + $0x68] sm:$0xff]
        %v479 = vld [vmem:[#allocation10 + $0x70] sm:$0xff]
        %v480 = vld [vmem:[#allocation10 + $0x78] sm:$0xff]
        %v481 = vpack.c.bf16 %v466, %v465
        %v482 = vpack.c.bf16 %v468, %v467
        %v483 = vpack.c.bf16 %v470, %v469
        %v484 = vpack.c.bf16 %v472, %v471
        %v485 = vpack.c.bf16 %v474, %v473
        %v486 = vpack.c.bf16 %v476, %v475
        %v487 = vpack.c.bf16 %v478, %v477
        %v488 = vpack.c.bf16 %v480, %v479
        %v489 = vld [vmem:[#allocation5] sm:$0xf]
        %v490 = vld [vmem:[#allocation5 + $0x4] sm:$0xf]
        %v491 = vld [vmem:[#allocation5 + $0x8] sm:$0xf]
        %v492 = vld [vmem:[#allocation5 + $0xc] sm:$0xf]
        %v493 = vld [vmem:[#allocation5 + $0x10] sm:$0xf]
        %v494 = vld [vmem:[#allocation5 + $0x14] sm:$0xf]
        %v495 = vld [vmem:[#allocation5 + $0x18] sm:$0xf]
        %v496 = vld [vmem:[#allocation5 + $0x1c] sm:$0xf]
        %v497 = vld [vmem:[#allocation5 + $0x20] sm:$0xf]
        %v498 = vld [vmem:[#allocation5 + $0x24] sm:$0xf]
        %v499 = vld [vmem:[#allocation5 + $0x28] sm:$0xf]
        %v500 = vld [vmem:[#allocation5 + $0x2c] sm:$0xf]
        %v501 = vld [vmem:[#allocation5 + $0x30] sm:$0xf]
        %v502 = vld [vmem:[#allocation5 + $0x34] sm:$0xf]
        %v503 = vld [vmem:[#allocation5 + $0x38] sm:$0xf]
        %v504 = vld [vmem:[#allocation5 + $0x3c] sm:$0xf]
        %v505 = vld [vmem:[%s364] sm:$0xf]
        %v506 = vld [vmem:[%s364 + $0x4] sm:$0xf]
        %v507 = vld [vmem:[%s364 + $0x8] sm:$0xf]
        %v508 = vld [vmem:[%s364 + $0xc] sm:$0xf]
        %v509 = vld [vmem:[%s364 + $0x10] sm:$0xf]
        %v510 = vld [vmem:[%s364 + $0x14] sm:$0xf]
        %v511 = vld [vmem:[%s364 + $0x18] sm:$0xf]
        %v512 = vld [vmem:[%s364 + $0x1c] sm:$0xf]
        %v513 = vld [vmem:[%s364 + $0x20] sm:$0xf]
        %v514 = vld [vmem:[%s364 + $0x24] sm:$0xf]
        %v515 = vld [vmem:[%s364 + $0x28] sm:$0xf]
        %v516 = vld [vmem:[%s364 + $0x2c] sm:$0xf]
        %v517 = vld [vmem:[%s364 + $0x30] sm:$0xf]
        %v518 = vld [vmem:[%s364 + $0x34] sm:$0xf]
        %v519 = vld [vmem:[%s364 + $0x38] sm:$0xf]
        %v520 = vld [vmem:[%s364 + $0x3c] sm:$0xf]
        %v537 = vunpack.c.l.b16 %v489
        %v538 = vunpack.c.l.b16 %v490
        %v539 = vunpack.c.l.b16 %v491
        %v540 = vunpack.c.l.b16 %v492
        %v541 = vunpack.c.l.b16 %v493
        %v542 = vunpack.c.l.b16 %v494
        %v543 = vunpack.c.l.b16 %v495
        %v544 = vunpack.c.l.b16 %v496
        %v545 = vunpack.c.l.b16 %v497
        %v546 = vunpack.c.l.b16 %v498
        %v547 = vunpack.c.l.b16 %v499
        %v548 = vunpack.c.l.b16 %v500
        %v549 = vunpack.c.l.b16 %v501
        %v550 = vunpack.c.l.b16 %v502
        %v551 = vunpack.c.l.b16 %v503
        %v552 = vunpack.c.l.b16 %v504
        %v553 = vpack.c.b16 %v538, %v537
        %v554 = vpack.c.b16 %v540, %v539
        %v555 = vpack.c.b16 %v542, %v541
        %v556 = vpack.c.b16 %v544, %v543
        %v557 = vpack.c.b16 %v546, %v545
        %v558 = vpack.c.b16 %v548, %v547
        %v559 = vpack.c.b16 %v550, %v549
        %v560 = vpack.c.b16 %v552, %v551
        %v585 = vunpack.c.l.b16 %v505
        %v586 = vunpack.c.l.b16 %v506
        %v587 = vunpack.c.l.b16 %v507
        %v588 = vunpack.c.l.b16 %v508
        %v589 = vunpack.c.l.b16 %v509
        %v590 = vunpack.c.l.b16 %v510
        %v591 = vunpack.c.l.b16 %v511
        %v592 = vunpack.c.l.b16 %v512
        %v593 = vunpack.c.l.b16 %v513
        %v594 = vunpack.c.l.b16 %v514
        %v595 = vunpack.c.l.b16 %v515
        %v596 = vunpack.c.l.b16 %v516
        %v597 = vunpack.c.l.b16 %v517
        %v598 = vunpack.c.l.b16 %v518
        %v599 = vunpack.c.l.b16 %v519
        %v600 = vunpack.c.l.b16 %v520
        %v601 = vpack.c.b16 %v586, %v585
        %v602 = vpack.c.b16 %v588, %v587
        %v603 = vpack.c.b16 %v590, %v589
        %v604 = vpack.c.b16 %v592, %v591
        %v605 = vpack.c.b16 %v594, %v593
        %v606 = vpack.c.b16 %v596, %v595
        %v607 = vpack.c.b16 %v598, %v597
        %v608 = vpack.c.b16 %v600, %v599
        %617 = vmatprep.subr.bf16.mxu0 0
        %618 = vmatpush1.bf16.msra.mxu0 %v601
        %619 = vmatprep.subr.bf16.mxu0 0
        %620 = vmatpush1.bf16.msra.mxu0 %v602
        %621 = vmatprep.subr.bf16.mxu0 0
        %622 = vmatpush1.bf16.msra.mxu0 %v603
        %623 = vmatprep.subr.bf16.mxu0 0
        %624 = vmatpush1.bf16.msra.mxu0 %v604
        %625 = vmatprep.subr.bf16.mxu0 0
        %626 = vmatpush1.bf16.msra.mxu0 %v605
        %627 = vmatprep.subr.bf16.mxu0 0
        %628 = vmatpush1.bf16.msra.mxu0 %v606
        %629 = vmatprep.subr.bf16.mxu0 0
        %630 = vmatpush1.bf16.msra.mxu0 %v607
        %631 = vmatprep.subr.bf16.mxu0 0
        %632 = vmatpush1.bf16.msra.mxu0 %v608
        %633 = vmatprep.subr.bf16.mxu0 0
        %634 = vmatpush1.bf16.msra.mxu0 0
        %635 = vmatprep.subr.bf16.mxu0 0
        %636 = vmatpush1.bf16.msra.mxu0 0
        %637 = vmatprep.subr.bf16.mxu0 0
        %638 = vmatpush1.bf16.msra.mxu0 0
        %639 = vmatprep.subr.bf16.mxu0 0
        %640 = vmatpush1.bf16.msra.mxu0 0
        %641 = vmatprep.subr.bf16.mxu0 0
        %642 = vmatpush1.bf16.msra.mxu0 0
        %643 = vmatprep.subr.bf16.mxu0 0
        %644 = vmatpush1.bf16.msra.mxu0 0
        %645 = vmatprep.subr.bf16.mxu0 0
        %646 = vmatpush1.bf16.msra.mxu0 0
        %647 = vmatprep.subr.bf16.mxu0 0
        %648 = vmatpush1.bf16.msra.mxu0 0
        %649 = vmatprep.mubr.bf16.mxu0 0
        %650 = vmatmul.mubr.bf16.gmra.mrb[0].mxu0 %v553
        %v651 = vpop.f32.mrb[0].mxu0
        %v652 = vadd.f32 0.0, %v651
        %v653 = vpop.f32.mrb[0].mxu0
        %v654 = vpop.f32.mrb[0].mxu0
        %v655 = vadd.f32 0.0, %v654
        %v656 = vpop.f32.mrb[0].mxu0
        %657 = vmatprep.mubr.bf16.mxu0 0
        %658 = vmatmul.mubr.bf16.gmra.mrb[0].mxu0 %v554
        %v659 = vpop.f32.mrb[0].mxu0
        %v660 = vadd.f32 0.0, %v659
        %v661 = vpop.f32.mrb[0].mxu0
        %v662 = vpop.f32.mrb[0].mxu0
        %v663 = vadd.f32 0.0, %v662
        %v664 = vpop.f32.mrb[0].mxu0
        %665 = vmatprep.mubr.bf16.mxu0 0
        %666 = vmatmul.mubr.bf16.gmra.mrb[0].mxu0 %v555
        %v667 = vpop.f32.mrb[0].mxu0
        %v668 = vadd.f32 0.0, %v667
        %v669 = vpop.f32.mrb[0].mxu0
        %v670 = vpop.f32.mrb[0].mxu0
        %v671 = vadd.f32 0.0, %v670
        %v672 = vpop.f32.mrb[0].mxu0
        %673 = vmatprep.mubr.bf16.mxu0 0
        %674 = vmatmul.mubr.bf16.gmra.mrb[0].mxu0 %v556
        %v675 = vpop.f32.mrb[0].mxu0
        %v676 = vadd.f32 0.0, %v675
        %v677 = vpop.f32.mrb[0].mxu0
        %v678 = vpop.f32.mrb[0].mxu0
        %v679 = vadd.f32 0.0, %v678
        %v680 = vpop.f32.mrb[0].mxu0
        %681 = vmatprep.mubr.bf16.mxu0 0
        %682 = vmatmul.mubr.bf16.gmra.mrb[0].mxu0 %v557
        %v683 = vpop.f32.mrb[0].mxu0
        %v684 = vadd.f32 0.0, %v683
        %v685 = vpop.f32.mrb[0].mxu0
        %v686 = vpop.f32.mrb[0].mxu0
        %v687 = vadd.f32 0.0, %v686
        %v688 = vpop.f32.mrb[0].mxu0
        %689 = vmatprep.mubr.bf16.mxu0 0
        %690 = vmatmul.mubr.bf16.gmra.mrb[0].mxu0 %v558
        %v691 = vpop.f32.mrb[0].mxu0
        %v692 = vadd.f32 0.0, %v691
        %v693 = vpop.f32.mrb[0].mxu0
        %v694 = vpop.f32.mrb[0].mxu0
        %v695 = vadd.f32 0.0, %v694
        %v696 = vpop.f32.mrb[0].mxu0
        %697 = vmatprep.mubr.bf16.mxu0 0
        %698 = vmatmul.mubr.bf16.gmra.mrb[0].mxu0 %v559
        %v699 = vpop.f32.mrb[0].mxu0
        %v700 = vadd.f32 0.0, %v699
        %v701 = vpop.f32.mrb[0].mxu0
        %v702 = vpop.f32.mrb[0].mxu0
        %v703 = vadd.f32 0.0, %v702
        %v704 = vpop.f32.mrb[0].mxu0
        %705 = vmatprep.mubr.bf16.mxu0 0
        %706 = vmatmul.mubr.bf16.gmra.mrb[0].mxu0 %v560
        %v707 = vpop.f32.mrb[0].mxu0
        %v708 = vadd.f32 0.0, %v707
        %v709 = vpop.f32.mrb[0].mxu0
        %v710 = vpop.f32.mrb[0].mxu0
        %v711 = vadd.f32 0.0, %v710
        %v712 = vpop.f32.mrb[0].mxu0
        %713 = vdwg.mxu0
        %v714 = vlaneseq
        %v715 = vand.u32 %v714, 127
        %v716 = vld [vmem:[%s1] sm:$0xff]
        %v717 = vld [vmem:[%s1 + $0x8] sm:$0xff]
        %v718 = vld [vmem:[%s1 + $0x10] sm:$0xff]
        %v719 = vld [vmem:[%s1 + $0x18] sm:$0xff]
        %v720 = vld [vmem:[%s1 + $0x20] sm:$0xff]
        %v721 = vld [vmem:[%s1 + $0x28] sm:$0xff]
        %v722 = vld [vmem:[%s1 + $0x30] sm:$0xff]
        %v723 = vld [vmem:[%s1 + $0x38] sm:$0xff]
        %v724 = vld [vmem:[%s1 + $0x40] sm:$0xff]
        %v725 = vld [vmem:[%s1 + $0x48] sm:$0xff]
        %v726 = vld [vmem:[%s1 + $0x50] sm:$0xff]
        %v727 = vld [vmem:[%s1 + $0x58] sm:$0xff]
        %v728 = vld [vmem:[%s1 + $0x60] sm:$0xff]
        %v729 = vld [vmem:[%s1 + $0x68] sm:$0xff]
        %v730 = vld [vmem:[%s1 + $0x70] sm:$0xff]
        %v731 = vld [vmem:[%s1 + $0x78] sm:$0xff]
        %732 = vset.pattern.permute.xlu0 0
        %733 = vperm.xlu0 %732, %v716
        %v734 = vpop.permute.xlu0 %733
        %735 = vset.pattern.permute.xlu0 0
        %736 = vperm.xlu0 %735, %v717
        %v737 = vpop.permute.xlu0 %736
        %738 = vset.pattern.permute.xlu0 0
        %739 = vperm.xlu0 %738, %v718
        %v740 = vpop.permute.xlu0 %739
        %741 = vset.pattern.permute.xlu0 0
        %742 = vperm.xlu0 %741, %v719
        %v743 = vpop.permute.xlu0 %742
        %744 = vset.pattern.permute.xlu0 0
        %745 = vperm.xlu0 %744, %v720
        %v746 = vpop.permute.xlu0 %745
        %747 = vset.pattern.permute.xlu0 0
        %748 = vperm.xlu0 %747, %v721
        %v749 = vpop.permute.xlu0 %748
        %750 = vset.pattern.permute.xlu0 0
        %751 = vperm.xlu0 %750, %v722
        %v752 = vpop.permute.xlu0 %751
        %753 = vset.pattern.permute.xlu0 0
        %754 = vperm.xlu0 %753, %v723
        %v755 = vpop.permute.xlu0 %754
        %756 = vset.pattern.permute.xlu0 0
        %757 = vperm.xlu0 %756, %v724
        %v758 = vpop.permute.xlu0 %757
        %759 = vset.pattern.permute.xlu0 0
        %760 = vperm.xlu0 %759, %v725
        %v761 = vpop.permute.xlu0 %760
        %762 = vset.pattern.permute.xlu0 0
        %763 = vperm.xlu0 %762, %v726
        %v764 = vpop.permute.xlu0 %763
        %765 = vset.pattern.permute.xlu0 0
        %766 = vperm.xlu0 %765, %v727
        %v767 = vpop.permute.xlu0 %766
        %768 = vset.pattern.permute.xlu0 0
        %769 = vperm.xlu0 %768, %v728
        %v770 = vpop.permute.xlu0 %769
        %771 = vset.pattern.permute.xlu0 0
        %772 = vperm.xlu0 %771, %v729
        %v773 = vpop.permute.xlu0 %772
        %774 = vset.pattern.permute.xlu0 0
        %775 = vperm.xlu0 %774, %v730
        %v776 = vpop.permute.xlu0 %775
        %777 = vset.pattern.permute.xlu0 0
        %778 = vperm.xlu0 %777, %v731
        %v779 = vpop.permute.xlu0 %778
        %vm780 = vcmp.eq.s32.totalorder %v715, %v734
        %vm781 = vcmp.eq.s32.totalorder %v715, %v737
        %vm782 = vcmp.eq.s32.totalorder %v715, %v740
        %vm783 = vcmp.eq.s32.totalorder %v715, %v743
        %vm784 = vcmp.eq.s32.totalorder %v715, %v746
        %vm785 = vcmp.eq.s32.totalorder %v715, %v749
        %vm786 = vcmp.eq.s32.totalorder %v715, %v752
        %vm787 = vcmp.eq.s32.totalorder %v715, %v755
        %vm788 = vcmp.eq.s32.totalorder %v715, %v758
        %vm789 = vcmp.eq.s32.totalorder %v715, %v761
        %vm790 = vcmp.eq.s32.totalorder %v715, %v764
        %vm791 = vcmp.eq.s32.totalorder %v715, %v767
        %vm792 = vcmp.eq.s32.totalorder %v715, %v770
        %vm793 = vcmp.eq.s32.totalorder %v715, %v773
        %vm794 = vcmp.eq.s32.totalorder %v715, %v776
        %vm795 = vcmp.eq.s32.totalorder %v715, %v779
        %v796 = vsel %vm780, 1, 0
        %v797 = vsel %vm781, 1, 0
        %v798 = vsel %vm782, 1, 0
        %v799 = vsel %vm783, 1, 0
        %v800 = vsel %vm784, 1, 0
        %v801 = vsel %vm785, 1, 0
        %v802 = vsel %vm786, 1, 0
        %v803 = vsel %vm787, 1, 0
        %v804 = vsel %vm788, 1, 0
        %v805 = vsel %vm789, 1, 0
        %v806 = vsel %vm790, 1, 0
        %v807 = vsel %vm791, 1, 0
        %v808 = vsel %vm792, 1, 0
        %v809 = vsel %vm793, 1, 0
        %v810 = vsel %vm794, 1, 0
        %v811 = vsel %vm795, 1, 0
        %v812 = vcvt.s32.f32 %v796
        %v813 = vcvt.s32.f32 %v797
        %v814 = vcvt.s32.f32 %v798
        %v815 = vcvt.s32.f32 %v799
        %v816 = vcvt.s32.f32 %v800
        %v817 = vcvt.s32.f32 %v801
        %v818 = vcvt.s32.f32 %v802
        %v819 = vcvt.s32.f32 %v803
        %v820 = vcvt.s32.f32 %v804
        %v821 = vcvt.s32.f32 %v805
        %v822 = vcvt.s32.f32 %v806
        %v823 = vcvt.s32.f32 %v807
        %v824 = vcvt.s32.f32 %v808
        %v825 = vcvt.s32.f32 %v809
        %v826 = vcvt.s32.f32 %v810
        %v827 = vcvt.s32.f32 %v811
        %v828 = vpack.c.bf16 %v813, %v812
        %v829 = vpack.c.bf16 %v815, %v814
        %v830 = vpack.c.bf16 %v817, %v816
        %v831 = vpack.c.bf16 %v819, %v818
        %v832 = vpack.c.bf16 %v821, %v820
        %v833 = vpack.c.bf16 %v823, %v822
        %v834 = vpack.c.bf16 %v825, %v824
        %v835 = vpack.c.bf16 %v827, %v826
        %836 = vmatprep.subr.bf16.mxu0 0
        %837 = vmatpush1.bf16.msra.mxu0 %v481
        %838 = vmatprep.subr.bf16.mxu0 0
        %839 = vmatpush1.bf16.msra.mxu0 %v482
        %840 = vmatprep.subr.bf16.mxu0 0
        %841 = vmatpush1.bf16.msra.mxu0 %v483
        %842 = vmatprep.subr.bf16.mxu0 0
        %843 = vmatpush1.bf16.msra.mxu0 %v484
        %844 = vmatprep.subr.bf16.mxu0 0
        %845 = vmatpush1.bf16.msra.mxu0 %v485
        %846 = vmatprep.subr.bf16.mxu0 0
        %847 = vmatpush1.bf16.msra.mxu0 %v486
        %848 = vmatprep.subr.bf16.mxu0 0
        %849 = vmatpush1.bf16.msra.mxu0 %v487
        %850 = vmatprep.subr.bf16.mxu0 0
        %851 = vmatpush1.bf16.msra.mxu0 %v488
        %852 = vmatprep.subr.bf16.mxu0 0
        %853 = vmatpush1.bf16.msra.mxu0 0
        %854 = vmatprep.subr.bf16.mxu0 0
        %855 = vmatpush1.bf16.msra.mxu0 0
        %856 = vmatprep.subr.bf16.mxu0 0
        %857 = vmatpush1.bf16.msra.mxu0 0
        %858 = vmatprep.subr.bf16.mxu0 0
        %859 = vmatpush1.bf16.msra.mxu0 0
        %860 = vmatprep.subr.bf16.mxu0 0
        %861 = vmatpush1.bf16.msra.mxu0 0
        %862 = vmatprep.subr.bf16.mxu0 0
        %863 = vmatpush1.bf16.msra.mxu0 0
        %864 = vmatprep.subr.bf16.mxu0 0
        %865 = vmatpush1.bf16.msra.mxu0 0
        %866 = vmatprep.subr.bf16.mxu0 0
        %867 = vmatpush1.bf16.msra.mxu0 0
        %868 = vmatprep.mubr.bf16.mxu0 0
        %869 = vmatmul.mubr.bf16.gmra.mrb[0].mxu0 %v828
        %v870 = vpop.f32.mrb[0].mxu0
        %v871 = vadd.f32 %v652, %v870
        %v872 = vpop.f32.mrb[0].mxu0
        %v873 = vpop.f32.mrb[0].mxu0
        %v874 = vadd.f32 %v655, %v873
        %v875 = vpop.f32.mrb[0].mxu0
        %876 = vmatprep.mubr.bf16.mxu0 0
        %877 = vmatmul.mubr.bf16.gmra.mrb[0].mxu0 %v829
        %v878 = vpop.f32.mrb[0].mxu0
        %v879 = vadd.f32 %v660, %v878
        %v880 = vpop.f32.mrb[0].mxu0
        %v881 = vpop.f32.mrb[0].mxu0
        %v882 = vadd.f32 %v663, %v881
        %v883 = vpop.f32.mrb[0].mxu0
        %884 = vmatprep.mubr.bf16.mxu0 0
        %885 = vmatmul.mubr.bf16.gmra.mrb[0].mxu0 %v830
        %v886 = vpop.f32.mrb[0].mxu0
        %v887 = vadd.f32 %v668, %v886
        %v888 = vpop.f32.mrb[0].mxu0
        %v889 = vpop.f32.mrb[0].mxu0
        %v890 = vadd.f32 %v671, %v889
        %v891 = vpop.f32.mrb[0].mxu0
        %892 = vmatprep.mubr.bf16.mxu0 0
        %893 = vmatmul.mubr.bf16.gmra.mrb[0].mxu0 %v831
        %v894 = vpop.f32.mrb[0].mxu0
        %v895 = vadd.f32 %v676, %v894
        %v896 = vpop.f32.mrb[0].mxu0
        %v897 = vpop.f32.mrb[0].mxu0
        %v898 = vadd.f32 %v679, %v897
        %v899 = vpop.f32.mrb[0].mxu0
        %900 = vmatprep.mubr.bf16.mxu0 0
        %901 = vmatmul.mubr.bf16.gmra.mrb[0].mxu0 %v832
        %v902 = vpop.f32.mrb[0].mxu0
        %v903 = vadd.f32 %v684, %v902
        %v904 = vpop.f32.mrb[0].mxu0
        %v905 = vpop.f32.mrb[0].mxu0
        %v906 = vadd.f32 %v687, %v905
        %v907 = vpop.f32.mrb[0].mxu0
        %908 = vmatprep.mubr.bf16.mxu0 0
        %909 = vmatmul.mubr.bf16.gmra.mrb[0].mxu0 %v833
        %v910 = vpop.f32.mrb[0].mxu0
        %v911 = vadd.f32 %v692, %v910
        %v912 = vpop.f32.mrb[0].mxu0
        %v913 = vpop.f32.mrb[0].mxu0
        %v914 = vadd.f32 %v695, %v913
        %v915 = vpop.f32.mrb[0].mxu0
        %916 = vmatprep.mubr.bf16.mxu0 0
        %917 = vmatmul.mubr.bf16.gmra.mrb[0].mxu0 %v834
        %v918 = vpop.f32.mrb[0].mxu0
        %v919 = vadd.f32 %v700, %v918
        %v920 = vpop.f32.mrb[0].mxu0
        %v921 = vpop.f32.mrb[0].mxu0
        %v922 = vadd.f32 %v703, %v921
        %v923 = vpop.f32.mrb[0].mxu0
        %924 = vmatprep.mubr.bf16.mxu0 0
        %925 = vmatmul.mubr.bf16.gmra.mrb[0].mxu0 %v835
        %v926 = vpop.f32.mrb[0].mxu0
        %v927 = vadd.f32 %v708, %v926
        %v928 = vpop.f32.mrb[0].mxu0
        %v929 = vpop.f32.mrb[0].mxu0
        %v930 = vadd.f32 %v711, %v929
        %v931 = vpop.f32.mrb[0].mxu0
        %932 = vdwg.mxu0
        %v933 = vmax.f32 %v871, 0.0
        %v934 = vmax.f32 %v874, 0.0
        %v935 = vmax.f32 %v879, 0.0
        %v936 = vmax.f32 %v882, 0.0
        %v937 = vmax.f32 %v887, 0.0
        %v938 = vmax.f32 %v890, 0.0
        %v939 = vmax.f32 %v895, 0.0
        %v940 = vmax.f32 %v898, 0.0
        %v941 = vmax.f32 %v903, 0.0
        %v942 = vmax.f32 %v906, 0.0
        %v943 = vmax.f32 %v911, 0.0
        %v944 = vmax.f32 %v914, 0.0
        %v945 = vmax.f32 %v919, 0.0
        %v946 = vmax.f32 %v922, 0.0
        %v947 = vmax.f32 %v927, 0.0
        %v948 = vmax.f32 %v930, 0.0
        %v949 = vpack.c.bf16 %v934, %v933
        %v950 = vpack.c.bf16 %v936, %v935
        %v951 = vpack.c.bf16 %v938, %v937
        %v952 = vpack.c.bf16 %v940, %v939
        %v953 = vpack.c.bf16 %v942, %v941
        %v954 = vpack.c.bf16 %v944, %v943
        %v955 = vpack.c.bf16 %v946, %v945
        %v956 = vpack.c.bf16 %v948, %v947
        %v957 = vlaneseq
        %v958 = vshrl.u32 %v957, 7
        %v959 = vadd.s32 %v958, 8
        %v960 = vadd.s32 %v958, 16
        %v961 = vadd.s32 %v958, 24
        %v962 = vadd.s32 %v958, 32
        %v963 = vadd.s32 %v958, 40
        %v964 = vadd.s32 %v958, 48
        %v965 = vadd.s32 %v958, 56
        %v966 = vadd.s32 %v958, 64
        %v967 = vadd.s32 %v958, 72
        %v968 = vadd.s32 %v958, 80
        %v969 = vadd.s32 %v958, 88
        %v970 = vadd.s32 %v958, 96
        %v971 = vadd.s32 %v958, 104
        %v972 = vadd.s32 %v958, 112
        %v973 = vadd.s32 %v958, 120
        %v974 = vld [vmem:[#allocation2] sm:$0x1]
        %v975 = vlaneseq
        %v976 = vshrl.u32 %v975, 7
        %v977 = vsub.s32 0, %v976
        %v978 = vrot.slane %v974, %v977
        %vm979 = vcmp.eq.s32.totalorder %v958, %v978
        %vm980 = vcmp.eq.s32.totalorder %v959, %v978
        %vm981 = vcmp.eq.s32.totalorder %v960, %v978
        %vm982 = vcmp.eq.s32.totalorder %v961, %v978
        %vm983 = vcmp.eq.s32.totalorder %v962, %v978
        %vm984 = vcmp.eq.s32.totalorder %v963, %v978
        %vm985 = vcmp.eq.s32.totalorder %v964, %v978
        %vm986 = vcmp.eq.s32.totalorder %v965, %v978
        %vm987 = vcmp.eq.s32.totalorder %v966, %v978
        %vm988 = vcmp.eq.s32.totalorder %v967, %v978
        %vm989 = vcmp.eq.s32.totalorder %v968, %v978
        %vm990 = vcmp.eq.s32.totalorder %v969, %v978
        %vm991 = vcmp.eq.s32.totalorder %v970, %v978
        %vm992 = vcmp.eq.s32.totalorder %v971, %v978
        %vm993 = vcmp.eq.s32.totalorder %v972, %v978
        %vm994 = vcmp.eq.s32.totalorder %v973, %v978
        %v995 = vsel %vm979, 1, 0
        %v996 = vsel %vm980, 1, 0
        %v997 = vsel %vm981, 1, 0
        %v998 = vsel %vm982, 1, 0
        %v999 = vsel %vm983, 1, 0
        %v1000 = vsel %vm984, 1, 0
        %v1001 = vsel %vm985, 1, 0
        %v1002 = vsel %vm986, 1, 0
        %v1003 = vsel %vm987, 1, 0
        %v1004 = vsel %vm988, 1, 0
        %v1005 = vsel %vm989, 1, 0
        %v1006 = vsel %vm990, 1, 0
        %v1007 = vsel %vm991, 1, 0
        %v1008 = vsel %vm992, 1, 0
        %v1009 = vsel %vm993, 1, 0
        %v1010 = vsel %vm994, 1, 0
        %v1011 = vcvt.s32.f32 %v995
        %v1012 = vcvt.s32.f32 %v996
        %v1013 = vcvt.s32.f32 %v997
        %v1014 = vcvt.s32.f32 %v998
        %v1015 = vcvt.s32.f32 %v999
        %v1016 = vcvt.s32.f32 %v1000
        %v1017 = vcvt.s32.f32 %v1001
        %v1018 = vcvt.s32.f32 %v1002
        %v1019 = vcvt.s32.f32 %v1003
        %v1020 = vcvt.s32.f32 %v1004
        %v1021 = vcvt.s32.f32 %v1005
        %v1022 = vcvt.s32.f32 %v1006
        %v1023 = vcvt.s32.f32 %v1007
        %v1024 = vcvt.s32.f32 %v1008
        %v1025 = vcvt.s32.f32 %v1009
        %v1026 = vcvt.s32.f32 %v1010
        %v1027 = vpack.c.bf16 %v1012, %v1011
        %v1028 = vpack.c.bf16 %v1014, %v1013
        %v1029 = vpack.c.bf16 %v1016, %v1015
        %v1030 = vpack.c.bf16 %v1018, %v1017
        %v1031 = vpack.c.bf16 %v1020, %v1019
        %v1032 = vpack.c.bf16 %v1022, %v1021
        %v1033 = vpack.c.bf16 %v1024, %v1023
        %v1034 = vpack.c.bf16 %v1026, %v1025
        %1035 = vmatprep.subr.bf16.mxu0 0
        %1036 = vmatpush1.bf16.msra.mxu0 %v949
        %1037 = vmatprep.subr.bf16.mxu0 0
        %1038 = vmatpush1.bf16.msra.mxu0 %v950
        %1039 = vmatprep.subr.bf16.mxu0 0
        %1040 = vmatpush1.bf16.msra.mxu0 %v951
        %1041 = vmatprep.subr.bf16.mxu0 0
        %1042 = vmatpush1.bf16.msra.mxu0 %v952
        %1043 = vmatprep.subr.bf16.mxu0 0
        %1044 = vmatpush1.bf16.msra.mxu0 %v953
        %1045 = vmatprep.subr.bf16.mxu0 0
        %1046 = vmatpush1.bf16.msra.mxu0 %v954
        %1047 = vmatprep.subr.bf16.mxu0 0
        %1048 = vmatpush1.bf16.msra.mxu0 %v955
        %1049 = vmatprep.subr.bf16.mxu0 0
        %1050 = vmatpush1.bf16.msra.mxu0 %v956
        %1051 = vmatprep.subr.bf16.mxu0 0
        %1052 = vmatpush1.bf16.msra.mxu0 0
        %1053 = vmatprep.subr.bf16.mxu0 0
        %1054 = vmatpush1.bf16.msra.mxu0 0
        %1055 = vmatprep.subr.bf16.mxu0 0
        %1056 = vmatpush1.bf16.msra.mxu0 0
        %1057 = vmatprep.subr.bf16.mxu0 0
        %1058 = vmatpush1.bf16.msra.mxu0 0
        %1059 = vmatprep.subr.bf16.mxu0 0
        %1060 = vmatpush1.bf16.msra.mxu0 0
        %1061 = vmatprep.subr.bf16.mxu0 0
        %1062 = vmatpush1.bf16.msra.mxu0 0
        %1063 = vmatprep.subr.bf16.mxu0 0
        %1064 = vmatpush1.bf16.msra.mxu0 0
        %1065 = vmatprep.subr.bf16.mxu0 0
        %1066 = vmatpush1.bf16.msra.mxu0 0
        %1067 = vmatprep.mubr.bf16.mxu0 0
        %1068 = vmatmul.mubr.bf16.gmra.mrb[0].mxu0 %v1027
        %v1069 = vpop.f32.mrb[0].mxu0
        %v1070 = vadd.f32 0.0, %v1069
        %v1071 = vpop.f32.mrb[0].mxu0
        %v1072 = vpop.f32.mrb[0].mxu0
        %v1073 = vadd.f32 0.0, %v1072
        %v1074 = vpop.f32.mrb[0].mxu0
        %1075 = vmatprep.mubr.bf16.mxu0 0
        %1076 = vmatmul.mubr.bf16.gmra.mrb[0].mxu0 %v1028
        %v1077 = vpop.f32.mrb[0].mxu0
        %v1078 = vadd.f32 0.0, %v1077
        %v1079 = vpop.f32.mrb[0].mxu0
        %v1080 = vpop.f32.mrb[0].mxu0
        %v1081 = vadd.f32 0.0, %v1080
        %v1082 = vpop.f32.mrb[0].mxu0
        %1083 = vmatprep.mubr.bf16.mxu0 0
        %1084 = vmatmul.mubr.bf16.gmra.mrb[0].mxu0 %v1029
        %v1085 = vpop.f32.mrb[0].mxu0
        %v1086 = vadd.f32 0.0, %v1085
        %v1087 = vpop.f32.mrb[0].mxu0
        %v1088 = vpop.f32.mrb[0].mxu0
        %v1089 = vadd.f32 0.0, %v1088
        %v1090 = vpop.f32.mrb[0].mxu0
        %1091 = vmatprep.mubr.bf16.mxu0 0
        %1092 = vmatmul.mubr.bf16.gmra.mrb[0].mxu0 %v1030
        %v1093 = vpop.f32.mrb[0].mxu0
        %v1094 = vadd.f32 0.0, %v1093
        %v1095 = vpop.f32.mrb[0].mxu0
        %v1096 = vpop.f32.mrb[0].mxu0
        %v1097 = vadd.f32 0.0, %v1096
        %v1098 = vpop.f32.mrb[0].mxu0
        %1099 = vmatprep.mubr.bf16.mxu0 0
        %1100 = vmatmul.mubr.bf16.gmra.mrb[0].mxu0 %v1031
        %v1101 = vpop.f32.mrb[0].mxu0
        %v1102 = vadd.f32 0.0, %v1101
        %v1103 = vpop.f32.mrb[0].mxu0
        %v1104 = vpop.f32.mrb[0].mxu0
        %v1105 = vadd.f32 0.0, %v1104
        %v1106 = vpop.f32.mrb[0].mxu0
        %1107 = vmatprep.mubr.bf16.mxu0 0
        %1108 = vmatmul.mubr.bf16.gmra.mrb[0].mxu0 %v1032
        %v1109 = vpop.f32.mrb[0].mxu0
        %v1110 = vadd.f32 0.0, %v1109
        %v1111 = vpop.f32.mrb[0].mxu0
        %v1112 = vpop.f32.mrb[0].mxu0
        %v1113 = vadd.f32 0.0, %v1112
        %v1114 = vpop.f32.mrb[0].mxu0
        %1115 = vmatprep.mubr.bf16.mxu0 0
        %1116 = vmatmul.mubr.bf16.gmra.mrb[0].mxu0 %v1033
        %v1117 = vpop.f32.mrb[0].mxu0
        %v1118 = vadd.f32 0.0, %v1117
        %v1119 = vpop.f32.mrb[0].mxu0
        %v1120 = vpop.f32.mrb[0].mxu0
        %v1121 = vadd.f32 0.0, %v1120
        %v1122 = vpop.f32.mrb[0].mxu0
        %1123 = vmatprep.mubr.bf16.mxu0 0
        %1124 = vmatmul.mubr.bf16.gmra.mrb[0].mxu0 %v1034
        %v1125 = vpop.f32.mrb[0].mxu0
        %v1126 = vadd.f32 0.0, %v1125
        %v1127 = vpop.f32.mrb[0].mxu0
        %v1128 = vpop.f32.mrb[0].mxu0
        %v1129 = vadd.f32 0.0, %v1128
        %v1130 = vpop.f32.mrb[0].mxu0
        %1131 = vdwg.mxu0
        %v1132 = vld [vmem:[%s427] sm:$0xff]
        %v1133 = vadd.f32 %v1132, 1.0
        %v1134 = vlaneseq
        %v1135 = vshrl.u32 %v1134, 7
        %v1136 = vsub.s32 2, %v1135
        %v1137 = vrot.slane %v1133, %v1136
        %v1138 = vmul.f32 %v1137, %v465
        %v1139 = vmul.f32 %v1137, %v466
        %v1140 = vmul.f32 %v1137, %v467
        %v1141 = vmul.f32 %v1137, %v468
        %v1142 = vmul.f32 %v1137, %v469
        %v1143 = vmul.f32 %v1137, %v470
        %v1144 = vmul.f32 %v1137, %v471
        %v1145 = vmul.f32 %v1137, %v472
        %v1146 = vmul.f32 %v1137, %v473
        %v1147 = vmul.f32 %v1137, %v474
        %v1148 = vmul.f32 %v1137, %v475
        %v1149 = vmul.f32 %v1137, %v476
        %v1150 = vmul.f32 %v1137, %v477
        %v1151 = vmul.f32 %v1137, %v478
        %v1152 = vmul.f32 %v1137, %v479
        %v1153 = vmul.f32 %v1137, %v480
        %v1154 = vadd.f32 %v1138, %v1070
        %v1155 = vadd.f32 %v1139, %v1073
        %v1156 = vadd.f32 %v1140, %v1078
        %v1157 = vadd.f32 %v1141, %v1081
        %v1158 = vadd.f32 %v1142, %v1086
        %v1159 = vadd.f32 %v1143, %v1089
        %v1160 = vadd.f32 %v1144, %v1094
        %v1161 = vadd.f32 %v1145, %v1097
        %v1162 = vadd.f32 %v1146, %v1102
        %v1163 = vadd.f32 %v1147, %v1105
        %v1164 = vadd.f32 %v1148, %v1110
        %v1165 = vadd.f32 %v1149, %v1113
        %v1166 = vadd.f32 %v1150, %v1118
        %v1167 = vadd.f32 %v1151, %v1121
        %v1168 = vadd.f32 %v1152, %v1126
        %v1169 = vadd.f32 %v1153, %v1129
        %v1170 = vpack.c.bf16 %v1155, %v1154
        %v1171 = vpack.c.bf16 %v1157, %v1156
        %v1172 = vpack.c.bf16 %v1159, %v1158
        %v1173 = vpack.c.bf16 %v1161, %v1160
        %v1174 = vpack.c.bf16 %v1163, %v1162
        %v1175 = vpack.c.bf16 %v1165, %v1164
        %v1176 = vpack.c.bf16 %v1167, %v1166
        %v1177 = vpack.c.bf16 %v1169, %v1168
        %v1178 = vld [vmem:[%s373] sm:$0xf]
        %v1179 = vld [vmem:[%s373 + $0x4] sm:$0xf]
        %v1180 = vld [vmem:[%s373 + $0x8] sm:$0xf]
        %v1181 = vld [vmem:[%s373 + $0xc] sm:$0xf]
        %v1182 = vld [vmem:[%s373 + $0x10] sm:$0xf]
        %v1183 = vld [vmem:[%s373 + $0x14] sm:$0xf]
        %v1184 = vld [vmem:[%s373 + $0x18] sm:$0xf]
        %v1185 = vld [vmem:[%s373 + $0x1c] sm:$0xf]
        %v1186 = vld [vmem:[%s373 + $0x20] sm:$0xf]
        %v1187 = vld [vmem:[%s373 + $0x24] sm:$0xf]
        %v1188 = vld [vmem:[%s373 + $0x28] sm:$0xf]
        %v1189 = vld [vmem:[%s373 + $0x2c] sm:$0xf]
        %v1190 = vld [vmem:[%s373 + $0x30] sm:$0xf]
        %v1191 = vld [vmem:[%s373 + $0x34] sm:$0xf]
        %v1192 = vld [vmem:[%s373 + $0x38] sm:$0xf]
        %v1193 = vld [vmem:[%s373 + $0x3c] sm:$0xf]
        %v1194 = vlaneseq
        %v1195 = vshrl.u32 %v1194, 7
        %v1196 = vsub.s32 0, %v1195
        %v1197 = vrot.slane %v1132, %v1196
        %v1214 = vunpack.c.l.b16 %v1178
        %v1215 = vunpack.c.l.b16 %v1179
        %v1216 = vunpack.c.l.b16 %v1180
        %v1217 = vunpack.c.l.b16 %v1181
        %v1218 = vunpack.c.l.b16 %v1182
        %v1219 = vunpack.c.l.b16 %v1183
        %v1220 = vunpack.c.l.b16 %v1184
        %v1221 = vunpack.c.l.b16 %v1185
        %v1222 = vunpack.c.l.b16 %v1186
        %v1223 = vunpack.c.l.b16 %v1187
        %v1224 = vunpack.c.l.b16 %v1188
        %v1225 = vunpack.c.l.b16 %v1189
        %v1226 = vunpack.c.l.b16 %v1190
        %v1227 = vunpack.c.l.b16 %v1191
        %v1228 = vunpack.c.l.b16 %v1192
        %v1229 = vunpack.c.l.b16 %v1193
        %v1230 = vpack.c.b16 %v1215, %v1214
        %v1231 = vpack.c.b16 %v1217, %v1216
        %v1232 = vpack.c.b16 %v1219, %v1218
        %v1233 = vpack.c.b16 %v1221, %v1220
        %v1234 = vpack.c.b16 %v1223, %v1222
        %v1235 = vpack.c.b16 %v1225, %v1224
        %v1236 = vpack.c.b16 %v1227, %v1226
        %v1237 = vpack.c.b16 %v1229, %v1228
        %1246 = vmatprep.subr.bf16.mxu0 0
        %1247 = vmatpush1.bf16.msra.mxu0 %v1230
        %1248 = vmatprep.subr.bf16.mxu0 0
        %1249 = vmatpush1.bf16.msra.mxu0 %v1231
        %1250 = vmatprep.subr.bf16.mxu0 0
        %1251 = vmatpush1.bf16.msra.mxu0 %v1232
        %1252 = vmatprep.subr.bf16.mxu0 0
        %1253 = vmatpush1.bf16.msra.mxu0 %v1233
        %1254 = vmatprep.subr.bf16.mxu0 0
        %1255 = vmatpush1.bf16.msra.mxu0 %v1234
        %1256 = vmatprep.subr.bf16.mxu0 0
        %1257 = vmatpush1.bf16.msra.mxu0 %v1235
        %1258 = vmatprep.subr.bf16.mxu0 0
        %1259 = vmatpush1.bf16.msra.mxu0 %v1236
        %1260 = vmatprep.subr.bf16.mxu0 0
        %1261 = vmatpush1.bf16.msra.mxu0 %v1237
        %1262 = vmatprep.subr.bf16.mxu0 0
        %1263 = vmatpush1.bf16.msra.mxu0 0
        %1264 = vmatprep.subr.bf16.mxu0 0
        %1265 = vmatpush1.bf16.msra.mxu0 0
        %1266 = vmatprep.subr.bf16.mxu0 0
        %1267 = vmatpush1.bf16.msra.mxu0 0
        %1268 = vmatprep.subr.bf16.mxu0 0
        %1269 = vmatpush1.bf16.msra.mxu0 0
        %1270 = vmatprep.subr.bf16.mxu0 0
        %1271 = vmatpush1.bf16.msra.mxu0 0
        %1272 = vmatprep.subr.bf16.mxu0 0
        %1273 = vmatpush1.bf16.msra.mxu0 0
        %1274 = vmatprep.subr.bf16.mxu0 0
        %1275 = vmatpush1.bf16.msra.mxu0 0
        %1276 = vmatprep.subr.bf16.mxu0 0
        %1277 = vmatpush1.bf16.msra.mxu0 0
        %1278 = vmatprep.mubr.bf16.mxu0 0
        %1279 = vmatmul.mubr.bf16.gmra.mrb[0].mxu0 %v1170
        %v1280 = vpop.f32.mrb[0].mxu0
        %v1281 = vadd.f32 %v1197, %v1280
        %v1282 = vpop.f32.mrb[0].mxu0
        %v1283 = vpop.f32.mrb[0].mxu0
        %v1284 = vadd.f32 %v1197, %v1283
        %v1285 = vpop.f32.mrb[0].mxu0
        %1286 = vmatprep.mubr.bf16.mxu0 0
        %1287 = vmatmul.mubr.bf16.gmra.mrb[0].mxu0 %v1171
        %v1288 = vpop.f32.mrb[0].mxu0
        %v1289 = vadd.f32 %v1197, %v1288
        %v1290 = vpop.f32.mrb[0].mxu0
        %v1291 = vpop.f32.mrb[0].mxu0
        %v1292 = vadd.f32 %v1197, %v1291
        %v1293 = vpop.f32.mrb[0].mxu0
        %1294 = vmatprep.mubr.bf16.mxu0 0
        %1295 = vmatmul.mubr.bf16.gmra.mrb[0].mxu0 %v1172
        %v1296 = vpop.f32.mrb[0].mxu0
        %v1297 = vadd.f32 %v1197, %v1296
        %v1298 = vpop.f32.mrb[0].mxu0
        %v1299 = vpop.f32.mrb[0].mxu0
        %v1300 = vadd.f32 %v1197, %v1299
        %v1301 = vpop.f32.mrb[0].mxu0
        %1302 = vmatprep.mubr.bf16.mxu0 0
        %1303 = vmatmul.mubr.bf16.gmra.mrb[0].mxu0 %v1173
        %v1304 = vpop.f32.mrb[0].mxu0
        %v1305 = vadd.f32 %v1197, %v1304
        %v1306 = vpop.f32.mrb[0].mxu0
        %v1307 = vpop.f32.mrb[0].mxu0
        %v1308 = vadd.f32 %v1197, %v1307
        %v1309 = vpop.f32.mrb[0].mxu0
        %1310 = vmatprep.mubr.bf16.mxu0 0
        %1311 = vmatmul.mubr.bf16.gmra.mrb[0].mxu0 %v1174
        %v1312 = vpop.f32.mrb[0].mxu0
        %v1313 = vadd.f32 %v1197, %v1312
        %v1314 = vpop.f32.mrb[0].mxu0
        %v1315 = vpop.f32.mrb[0].mxu0
        %v1316 = vadd.f32 %v1197, %v1315
        %v1317 = vpop.f32.mrb[0].mxu0
        %1318 = vmatprep.mubr.bf16.mxu0 0
        %1319 = vmatmul.mubr.bf16.gmra.mrb[0].mxu0 %v1175
        %v1320 = vpop.f32.mrb[0].mxu0
        %v1321 = vadd.f32 %v1197, %v1320
        %v1322 = vpop.f32.mrb[0].mxu0
        %v1323 = vpop.f32.mrb[0].mxu0
        %v1324 = vadd.f32 %v1197, %v1323
        %v1325 = vpop.f32.mrb[0].mxu0
        %1326 = vmatprep.mubr.bf16.mxu0 0
        %1327 = vmatmul.mubr.bf16.gmra.mrb[0].mxu0 %v1176
        %v1328 = vpop.f32.mrb[0].mxu0
        %v1329 = vadd.f32 %v1197, %v1328
        %v1330 = vpop.f32.mrb[0].mxu0
        %v1331 = vpop.f32.mrb[0].mxu0
        %v1332 = vadd.f32 %v1197, %v1331
        %v1333 = vpop.f32.mrb[0].mxu0
        %1334 = vmatprep.mubr.bf16.mxu0 0
        %1335 = vmatmul.mubr.bf16.gmra.mrb[0].mxu0 %v1177
        %v1336 = vpop.f32.mrb[0].mxu0
        %v1337 = vadd.f32 %v1197, %v1336
        %v1338 = vpop.f32.mrb[0].mxu0
        %v1339 = vpop.f32.mrb[0].mxu0
        %v1340 = vadd.f32 %v1197, %v1339
        %v1341 = vpop.f32.mrb[0].mxu0
        %1342 = vdwg.mxu0
        %v1343 = vmax.f32 %v1281, 0.0
        %v1344 = vmax.f32 %v1284, 0.0
        %v1345 = vmax.f32 %v1289, 0.0
        %v1346 = vmax.f32 %v1292, 0.0
        %v1347 = vmax.f32 %v1297, 0.0
        %v1348 = vmax.f32 %v1300, 0.0
        %v1349 = vmax.f32 %v1305, 0.0
        %v1350 = vmax.f32 %v1308, 0.0
        %v1351 = vmax.f32 %v1313, 0.0
        %v1352 = vmax.f32 %v1316, 0.0
        %v1353 = vmax.f32 %v1321, 0.0
        %v1354 = vmax.f32 %v1324, 0.0
        %v1355 = vmax.f32 %v1329, 0.0
        %v1356 = vmax.f32 %v1332, 0.0
        %v1357 = vmax.f32 %v1337, 0.0
        %v1358 = vmax.f32 %v1340, 0.0
        %v1359 = vpack.c.bf16 %v1344, %v1343
        %v1360 = vpack.c.bf16 %v1346, %v1345
        %v1361 = vpack.c.bf16 %v1348, %v1347
        %v1362 = vpack.c.bf16 %v1350, %v1349
        %v1363 = vpack.c.bf16 %v1352, %v1351
        %v1364 = vpack.c.bf16 %v1354, %v1353
        %v1365 = vpack.c.bf16 %v1356, %v1355
        %v1366 = vpack.c.bf16 %v1358, %v1357
        %v1367 = vld [vmem:[%s382] sm:$0xf]
        %v1368 = vld [vmem:[%s382 + $0x4] sm:$0xf]
        %v1369 = vld [vmem:[%s382 + $0x8] sm:$0xf]
        %v1370 = vld [vmem:[%s382 + $0xc] sm:$0xf]
        %v1371 = vld [vmem:[%s382 + $0x10] sm:$0xf]
        %v1372 = vld [vmem:[%s382 + $0x14] sm:$0xf]
        %v1373 = vld [vmem:[%s382 + $0x18] sm:$0xf]
        %v1374 = vld [vmem:[%s382 + $0x1c] sm:$0xf]
        %v1375 = vld [vmem:[%s382 + $0x20] sm:$0xf]
        %v1376 = vld [vmem:[%s382 + $0x24] sm:$0xf]
        %v1377 = vld [vmem:[%s382 + $0x28] sm:$0xf]
        %v1378 = vld [vmem:[%s382 + $0x2c] sm:$0xf]
        %v1379 = vld [vmem:[%s382 + $0x30] sm:$0xf]
        %v1380 = vld [vmem:[%s382 + $0x34] sm:$0xf]
        %v1381 = vld [vmem:[%s382 + $0x38] sm:$0xf]
        %v1382 = vld [vmem:[%s382 + $0x3c] sm:$0xf]
        %v1383 = vlaneseq
        %v1384 = vshrl.u32 %v1383, 7
        %v1385 = vsub.s32 1, %v1384
        %v1386 = vrot.slane %v1132, %v1385
        %v1403 = vunpack.c.l.b16 %v1367
        %v1404 = vunpack.c.l.b16 %v1368
        %v1405 = vunpack.c.l.b16 %v1369
        %v1406 = vunpack.c.l.b16 %v1370
        %v1407 = vunpack.c.l.b16 %v1371
        %v1408 = vunpack.c.l.b16 %v1372
        %v1409 = vunpack.c.l.b16 %v1373
        %v1410 = vunpack.c.l.b16 %v1374
        %v1411 = vunpack.c.l.b16 %v1375
        %v1412 = vunpack.c.l.b16 %v1376
        %v1413 = vunpack.c.l.b16 %v1377
        %v1414 = vunpack.c.l.b16 %v1378
        %v1415 = vunpack.c.l.b16 %v1379
        %v1416 = vunpack.c.l.b16 %v1380
        %v1417 = vunpack.c.l.b16 %v1381
        %v1418 = vunpack.c.l.b16 %v1382
        %v1419 = vpack.c.b16 %v1404, %v1403
        %v1420 = vpack.c.b16 %v1406, %v1405
        %v1421 = vpack.c.b16 %v1408, %v1407
        %v1422 = vpack.c.b16 %v1410, %v1409
        %v1423 = vpack.c.b16 %v1412, %v1411
        %v1424 = vpack.c.b16 %v1414, %v1413
        %v1425 = vpack.c.b16 %v1416, %v1415
        %v1426 = vpack.c.b16 %v1418, %v1417
        %1435 = vmatprep.subr.bf16.mxu0 0
        %1436 = vmatpush1.bf16.msra.mxu0 %v1419
        %1437 = vmatprep.subr.bf16.mxu0 0
        %1438 = vmatpush1.bf16.msra.mxu0 %v1420
        %1439 = vmatprep.subr.bf16.mxu0 0
        %1440 = vmatpush1.bf16.msra.mxu0 %v1421
        %1441 = vmatprep.subr.bf16.mxu0 0
        %1442 = vmatpush1.bf16.msra.mxu0 %v1422
        %1443 = vmatprep.subr.bf16.mxu0 0
        %1444 = vmatpush1.bf16.msra.mxu0 %v1423
        %1445 = vmatprep.subr.bf16.mxu0 0
        %1446 = vmatpush1.bf16.msra.mxu0 %v1424
        %1447 = vmatprep.subr.bf16.mxu0 0
        %1448 = vmatpush1.bf16.msra.mxu0 %v1425
        %1449 = vmatprep.subr.bf16.mxu0 0
        %1450 = vmatpush1.bf16.msra.mxu0 %v1426
        %1451 = vmatprep.subr.bf16.mxu0 0
        %1452 = vmatpush1.bf16.msra.mxu0 0
        %1453 = vmatprep.subr.bf16.mxu0 0
        %1454 = vmatpush1.bf16.msra.mxu0 0
        %1455 = vmatprep.subr.bf16.mxu0 0
        %1456 = vmatpush1.bf16.msra.mxu0 0
        %1457 = vmatprep.subr.bf16.mxu0 0
        %1458 = vmatpush1.bf16.msra.mxu0 0
        %1459 = vmatprep.subr.bf16.mxu0 0
        %1460 = vmatpush1.bf16.msra.mxu0 0
        %1461 = vmatprep.subr.bf16.mxu0 0
        %1462 = vmatpush1.bf16.msra.mxu0 0
        %1463 = vmatprep.subr.bf16.mxu0 0
        %1464 = vmatpush1.bf16.msra.mxu0 0
        %1465 = vmatprep.subr.bf16.mxu0 0
        %1466 = vmatpush1.bf16.msra.mxu0 0
        %1467 = vmatprep.mubr.bf16.mxu0 0
        %1468 = vmatmul.mubr.bf16.gmra.mrb[0].mxu0 %v1359
        %v1469 = vpop.f32.mrb[0].mxu0
        %v1470 = vadd.f32 %v1386, %v1469
        %v1471 = vpop.f32.mrb[0].mxu0
        %v1472 = vpop.f32.mrb[0].mxu0
        %v1473 = vadd.f32 %v1386, %v1472
        %v1474 = vpop.f32.mrb[0].mxu0
        %1475 = vmatprep.mubr.bf16.mxu0 0
        %1476 = vmatmul.mubr.bf16.gmra.mrb[0].mxu0 %v1360
        %v1477 = vpop.f32.mrb[0].mxu0
        %v1478 = vadd.f32 %v1386, %v1477
        %v1479 = vpop.f32.mrb[0].mxu0
        %v1480 = vpop.f32.mrb[0].mxu0
        %v1481 = vadd.f32 %v1386, %v1480
        %v1482 = vpop.f32.mrb[0].mxu0
        %1483 = vmatprep.mubr.bf16.mxu0 0
        %1484 = vmatmul.mubr.bf16.gmra.mrb[0].mxu0 %v1361
        %v1485 = vpop.f32.mrb[0].mxu0
        %v1486 = vadd.f32 %v1386, %v1485
        %v1487 = vpop.f32.mrb[0].mxu0
        %v1488 = vpop.f32.mrb[0].mxu0
        %v1489 = vadd.f32 %v1386, %v1488
        %v1490 = vpop.f32.mrb[0].mxu0
        %1491 = vmatprep.mubr.bf16.mxu0 0
        %1492 = vmatmul.mubr.bf16.gmra.mrb[0].mxu0 %v1362
        %v1493 = vpop.f32.mrb[0].mxu0
        %v1494 = vadd.f32 %v1386, %v1493
        %v1495 = vpop.f32.mrb[0].mxu0
        %v1496 = vpop.f32.mrb[0].mxu0
        %v1497 = vadd.f32 %v1386, %v1496
        %v1498 = vpop.f32.mrb[0].mxu0
        %1499 = vmatprep.mubr.bf16.mxu0 0
        %1500 = vmatmul.mubr.bf16.gmra.mrb[0].mxu0 %v1363
        %v1501 = vpop.f32.mrb[0].mxu0
        %v1502 = vadd.f32 %v1386, %v1501
        %v1503 = vpop.f32.mrb[0].mxu0
        %v1504 = vpop.f32.mrb[0].mxu0
        %v1505 = vadd.f32 %v1386, %v1504
        %v1506 = vpop.f32.mrb[0].mxu0
        %1507 = vmatprep.mubr.bf16.mxu0 0
        %1508 = vmatmul.mubr.bf16.gmra.mrb[0].mxu0 %v1364
        %v1509 = vpop.f32.mrb[0].mxu0
        %v1510 = vadd.f32 %v1386, %v1509
        %v1511 = vpop.f32.mrb[0].mxu0
        %v1512 = vpop.f32.mrb[0].mxu0
        %v1513 = vadd.f32 %v1386, %v1512
        %v1514 = vpop.f32.mrb[0].mxu0
        %1515 = vmatprep.mubr.bf16.mxu0 0
        %1516 = vmatmul.mubr.bf16.gmra.mrb[0].mxu0 %v1365
        %v1517 = vpop.f32.mrb[0].mxu0
        %v1518 = vadd.f32 %v1386, %v1517
        %v1519 = vpop.f32.mrb[0].mxu0
        %v1520 = vpop.f32.mrb[0].mxu0
        %v1521 = vadd.f32 %v1386, %v1520
        %v1522 = vpop.f32.mrb[0].mxu0
        %1523 = vmatprep.mubr.bf16.mxu0 0
        %1524 = vmatmul.mubr.bf16.gmra.mrb[0].mxu0 %v1366
        %v1525 = vpop.f32.mrb[0].mxu0
        %v1526 = vadd.f32 %v1386, %v1525
        %v1527 = vpop.f32.mrb[0].mxu0
        %v1528 = vpop.f32.mrb[0].mxu0
        %v1529 = vadd.f32 %v1386, %v1528
        %v1530 = vpop.f32.mrb[0].mxu0
        %1531 = vdwg.mxu0
        %p1532 = scmp.eq.s32.totalorder %s22, 1
        %vm1533 = vcmp.gt.f32.partialorder %v1470, 0.0
        %vm1534 = vcmp.gt.f32.partialorder %v1473, 0.0
        %vm1535 = vcmp.gt.f32.partialorder %v1478, 0.0
        %vm1536 = vcmp.gt.f32.partialorder %v1481, 0.0
        %vm1537 = vcmp.gt.f32.partialorder %v1486, 0.0
        %vm1538 = vcmp.gt.f32.partialorder %v1489, 0.0
        %vm1539 = vcmp.gt.f32.partialorder %v1494, 0.0
        %vm1540 = vcmp.gt.f32.partialorder %v1497, 0.0
        %vm1541 = vcmp.gt.f32.partialorder %v1502, 0.0
        %vm1542 = vcmp.gt.f32.partialorder %v1505, 0.0
        %vm1543 = vcmp.gt.f32.partialorder %v1510, 0.0
        %vm1544 = vcmp.gt.f32.partialorder %v1513, 0.0
        %vm1545 = vcmp.gt.f32.partialorder %v1518, 0.0
        %vm1546 = vcmp.gt.f32.partialorder %v1521, 0.0
        %vm1547 = vcmp.gt.f32.partialorder %v1526, 0.0
        %vm1548 = vcmp.gt.f32.partialorder %v1529, 0.0
        %s1549 = scalar_select %p1532, 1, 0
        %v1550 = vstv %s1549
        %vm1551 = vcmp.eq.s32.totalorder %v1550, 1
        %vm1552 = vmor %vm1551, %vm1533
        %vm1553 = vmor %vm1551, %vm1534
        %vm1554 = vmor %vm1551, %vm1535
        %vm1555 = vmor %vm1551, %vm1536
        %vm1556 = vmor %vm1551, %vm1537
        %vm1557 = vmor %vm1551, %vm1538
        %vm1558 = vmor %vm1551, %vm1539
        %vm1559 = vmor %vm1551, %vm1540
        %vm1560 = vmor %vm1551, %vm1541
        %vm1561 = vmor %vm1551, %vm1542
        %vm1562 = vmor %vm1551, %vm1543
        %vm1563 = vmor %vm1551, %vm1544
        %vm1564 = vmor %vm1551, %vm1545
        %vm1565 = vmor %vm1551, %vm1546
        %vm1566 = vmor %vm1551, %vm1547
        %vm1567 = vmor %vm1551, %vm1548
        %v1568 = vsel %vm1552, %v1470, 0.0
        %v1569 = vsel %vm1553, %v1473, 0.0
        %v1570 = vsel %vm1554, %v1478, 0.0
        %v1571 = vsel %vm1555, %v1481, 0.0
        %v1572 = vsel %vm1556, %v1486, 0.0
        %v1573 = vsel %vm1557, %v1489, 0.0
        %v1574 = vsel %vm1558, %v1494, 0.0
        %v1575 = vsel %vm1559, %v1497, 0.0
        %v1576 = vsel %vm1560, %v1502, 0.0
        %v1577 = vsel %vm1561, %v1505, 0.0
        %v1578 = vsel %vm1562, %v1510, 0.0
        %v1579 = vsel %vm1563, %v1513, 0.0
        %v1580 = vsel %vm1564, %v1518, 0.0
        %v1581 = vsel %vm1565, %v1521, 0.0
        %v1582 = vsel %vm1566, %v1526, 0.0
        %v1583 = vsel %vm1567, %v1529, 0.0
        %v1584 = vadd.f32 %v1568, %v465
        %v1585 = vadd.f32 %v1569, %v466
        %v1586 = vadd.f32 %v1570, %v467
        %v1587 = vadd.f32 %v1571, %v468
        %v1588 = vadd.f32 %v1572, %v469
        %v1589 = vadd.f32 %v1573, %v470
        %v1590 = vadd.f32 %v1574, %v471
        %v1591 = vadd.f32 %v1575, %v472
        %v1592 = vadd.f32 %v1576, %v473
        %v1593 = vadd.f32 %v1577, %v474
        %v1594 = vadd.f32 %v1578, %v475
        %v1595 = vadd.f32 %v1579, %v476
        %v1596 = vadd.f32 %v1580, %v477
        %v1597 = vadd.f32 %v1581, %v478
        %v1598 = vadd.f32 %v1582, %v479
        %v1599 = vadd.f32 %v1583, %v480
        %1600 = vst [vmem:[#allocation10] sm:$0xff] %v1584
        %1601 = vst [vmem:[#allocation10 + $0x8] sm:$0xff] %v1585
        %1602 = vst [vmem:[#allocation10 + $0x10] sm:$0xff] %v1586
        %1603 = vst [vmem:[#allocation10 + $0x18] sm:$0xff] %v1587
        %1604 = vst [vmem:[#allocation10 + $0x20] sm:$0xff] %v1588
        %1605 = vst [vmem:[#allocation10 + $0x28] sm:$0xff] %v1589
        %1606 = vst [vmem:[#allocation10 + $0x30] sm:$0xff] %v1590
        %1607 = vst [vmem:[#allocation10 + $0x38] sm:$0xff] %v1591
        %1608 = vst [vmem:[#allocation10 + $0x40] sm:$0xff] %v1592
        %1609 = vst [vmem:[#allocation10 + $0x48] sm:$0xff] %v1593
        %1610 = vst [vmem:[#allocation10 + $0x50] sm:$0xff] %v1594
        %1611 = vst [vmem:[#allocation10 + $0x58] sm:$0xff] %v1595
        %1612 = vst [vmem:[#allocation10 + $0x60] sm:$0xff] %v1596
        %1613 = vst [vmem:[#allocation10 + $0x68] sm:$0xff] %v1597
        %1614 = vst [vmem:[#allocation10 + $0x70] sm:$0xff] %v1598
        %1615 = vst [vmem:[#allocation10 + $0x78] sm:$0xff] %v1599
        // Predicated region
        $region77: #{tpu_custom_call.1} parent=51 // pred_check
          %p1616 = pneg %p223
        $region78: #{tpu_custom_call.1} parent=51 // pred_check_branch
          %1618 = sbr.rel (%p1616) target = $region80
        $region79: #{tpu_custom_call.1} parent=51 // pred_region
          %s1620 = ssub.s32 2048, 2048
          %1621 = vsyncadd [#allocation4], %s1620
          %s1622 = sshll.u32 [#allocation10], 4
          %s1623 = int_to_ptr.vmem [resolvable:$true] %s1622
          %1628 = dma.vmem_to_hbm [thread:$0]  %s1623, 2048, %s8, [#allocation4], 128, 128, 8
        $region80: #{tpu_custom_call.1} parent=51 // pred_fallthru
          _
        // Predicated region
        $region81: #{tpu_custom_call.1} parent=51 // pred_check
          %p1629 = pneg %p223
        $region82: #{tpu_custom_call.1} parent=51 // pred_check_branch
          %1631 = sbr.rel (%p1629) target = $region84
        $region83: #{tpu_custom_call.1} parent=51 // pred_region
          %1632 = dma.done [#allocation4], 2048
        $region84: #{tpu_custom_call.1} parent=51 // pred_fallthru
          _
      $region52: #{tpu_custom_call.1} parent=5 // pred_fallthru
        _
      %p1633 = scmp.le.s32.totalorder 2, %s17
      // Predicated region
      $region85: #{tpu_custom_call.1} parent=5 // pred_check
        %p1634 = pneg %p1633
      $region86: #{tpu_custom_call.1} parent=5 // pred_check_branch
        %1636 = sbr.rel (%p1634) target = $region88
      $region87: #{tpu_custom_call.1} parent=5 // pred_region
        %s1637 = ssub.s32 %s17, 2
      $region88: #{tpu_custom_call.1} parent=5 // pred_fallthru
        _
    $region6: #{tpu_custom_call.1} parent=1 // loop_footer
      %s21 = sadd.s32 1, %s17
    $region7: #{tpu_custom_call.1} parent=1 // loop_footer_branch
      %16 = sbr.rel target = $region3
    $region8: #{tpu_custom_call.1} parent=1 // loop_exit
      _
    %1638 = vsyncpa [#allocation3], 1
    %s1639 = scalar_lea.sflag [#allocation3], 1
    %1640 = vsyncpa %s1639, 1
    %1641 = vsyncpa [#allocation6], 1
    %1642 = vsyncpa [#allocation4], 1
    %s1643 = scalar_lea.sflag [#allocation4], 1
    %1644 = vsyncpa %s1643, 1

</llo_original>
